<compile_context>
chip_gen: v5e
topology: v5e:2x2
jax: 0.10.0
libtpu: 0.0.40
codegen_flags: <defaults>
</compile_context>

<pallas_src>
import jax
import jax.numpy as jnp
from jax import lax
from jax.experimental import pallas as pl
from jax.experimental.pallas import tpu as pltpu


def _pick_row_tile(H, W):
    """Smallest row tile TH that divides H and keeps the output block lane-dense."""
    for th in range(1, H):
        if H % th == 0 and (th * W) % 128 == 0:
            return th
    return H  # single tile; block last dim == full dim, still legal


def _make_basic_block_kernel(H, W, C, TH):
    def im2col_dot(slab, w_ref, rows):
        # slab: (rows+2, W+2, C) bf16, zero-padded activations.
        # Fold the 3x3 taps into the contraction dim: one (rows*W, 9C)@(9C, C)
        # MXU matmul with f32 accumulation.
        cols = []
        for kh in range(3):
            for kw in range(3):
                cols.append(slab[kh:kh + rows, kw:kw + W, :])
        patches = jnp.concatenate(cols, axis=-1)             # (rows, W, 9C) bf16
        patches = patches.reshape(rows * W, 9 * C)
        return jnp.dot(patches, w_ref[...],
                       preferred_element_type=jnp.float32)   # (rows*W, C) f32

    def kernel(x_ref, w1_ref, b1_ref, w2_ref, b2_ref, o_ref, xpad_ref, y1_ref):
        t = pl.program_id(1)
        n_t = pl.num_programs(1)
        r0 = pl.multiple_of(t * TH, TH)      # first output row of this tile

        # Once per image (t == 0): stage the zero-padded input in VMEM as bf16.
        # Border rows/cols of both scratches stay zero afterwards; interiors
        # are (re)written below, so this is safe under any megacore partition
        # of the batch axis.
        @pl.when(t == 0)
        def _():
            xpad_ref[...] = jnp.zeros_like(xpad_ref)
            y1_ref[...] = jnp.zeros_like(y1_ref)
            xpad_ref[2:H + 2, 1:W + 1, :] = x_ref[0].astype(jnp.bfloat16)

        # ---- conv1 (BN1 folded) + bias + ReLU for rows [r0-1, r0+TH+1) ------
        a1 = xpad_ref[pl.ds(r0, TH + 4)]                     # (TH+4, W+2, C) bf16
        y1 = im2col_dot(a1, w1_ref, TH + 2) + b1_ref[...]
        y1 = jnp.maximum(y1, 0.0).reshape(TH + 2, W, C)
        y1_ref[:, 1:W + 1, :] = y1.astype(jnp.bfloat16)

        # Halo rows that fall outside the image are conv2's zero padding, not
        # conv1 outputs: zero exactly one scratch row on the first/last tile.
        @pl.when(t == 0)
        def _():
            y1_ref[0:1] = jnp.zeros((1, W + 2, C), jnp.bfloat16)

        @pl.when(t == n_t - 1)
        def _():
            y1_ref[TH + 1:TH + 2] = jnp.zeros((1, W + 2, C), jnp.bfloat16)

        # ---- conv2 (BN2 folded) + bias + residual + ReLU for rows [r0, r0+TH)
        c2 = im2col_dot(y1_ref[...], w2_ref, TH) + b2_ref[...]
        res = x_ref[0, pl.ds(r0, TH)].reshape(TH * W, C)     # identity, f32
        out = jnp.maximum(c2 + res, 0.0)                     # (TH*W, C) f32
        # Lane-dense store: output array is (N, C, H*W), block (1, C, TH*W).
        o_ref[0] = jnp.transpose(out, (1, 0))                # (C, TH*W)

    return kernel


@jax.jit
def basic_block_forward(x_nchw, w1, s1, b1, w2, s2, b2):
    """BasicBlock forward (stride=1, downsample=None). Input/output: NCHW fp32."""
    N, C, H, W = x_nchw.shape
    assert w1.shape == (3, 3, C, C) and w2.shape == (3, 3, C, C), (
        "stride=1, downsample=None => inplanes == planes")

    x_nhwc = jnp.transpose(x_nchw, (0, 2, 3, 1)).astype(jnp.float32)
    # Fold BN scale into the conv weights (conv(x, w)*s + b == conv(x, w*s) + b),
    # reshape the 3x3 taps into the contraction dim, cast to bf16 for the MXU.
    w1_eff = (w1.reshape(9 * C, C) * s1[None, :]).astype(jnp.bfloat16)
    w2_eff = (w2.reshape(9 * C, C) * s2[None, :]).astype(jnp.bfloat16)
    b1_2 = b1.reshape(1, C).astype(jnp.float32)
    b2_2 = b2.reshape(1, C).astype(jnp.float32)

    TH = _pick_row_tile(H, W)
    T = H // TH

    out_flat = pl.pallas_call(
        _make_basic_block_kernel(H, W, C, TH),
        out_shape=jax.ShapeDtypeStruct((N, C, H * W), jnp.float32),
        grid=(N, T),
        in_specs=[
            pl.BlockSpec((1, H, W, C), lambda n, t: (n, 0, 0, 0)),  # full image
            pl.BlockSpec((9 * C, C), lambda n, t: (0, 0)),          # w1 (folded)
            pl.BlockSpec((1, C), lambda n, t: (0, 0)),              # bias1
            pl.BlockSpec((9 * C, C), lambda n, t: (0, 0)),          # w2 (folded)
            pl.BlockSpec((1, C), lambda n, t: (0, 0)),              # bias2
        ],
        out_specs=pl.BlockSpec((1, C, TH * W), lambda n, t: (n, 0, t)),
        scratch_shapes=[
            pltpu.VMEM((H + 4, W + 2, C), jnp.bfloat16),    # padded input slab
            pltpu.VMEM((TH + 2, W + 2, C), jnp.bfloat16),   # padded conv1 tile
        ],
        compiler_params=pltpu.CompilerParams(
            dimension_semantics=("parallel", "arbitrary")),
    )(x_nhwc, w1_eff, b1_2, w2_eff, b2_2)

    return out_flat.reshape(N, C, H, W)


def init_basic_block_params(key, inplanes, planes, eps=1e-5):
    """Deterministic synthetic parameters (conv weights + folded eval-mode BN)."""
    ks = jax.random.split(key, 8)
    w1 = jax.random.normal(ks[0], (3, 3, inplanes, planes), jnp.float32) * 0.1
    w2 = jax.random.normal(ks[1], (3, 3, planes, planes), jnp.float32) * 0.1
    g1 = 1.0 + 0.1 * jax.random.normal(ks[2], (planes,), jnp.float32)
    b1 = 0.1 * jax.random.normal(ks[3], (planes,), jnp.float32)
    m1 = 0.05 * jax.random.normal(ks[4], (planes,), jnp.float32)
    v1 = 1.0 + 0.1 * jax.random.uniform(ks[5], (planes,), jnp.float32)
    g2 = 1.0 + 0.1 * jax.random.normal(ks[6], (planes,), jnp.float32)
    b2 = 0.1 * jax.random.normal(ks[7], (planes,), jnp.float32)
    m2 = jnp.zeros((planes,), jnp.float32)
    v2 = jnp.ones((planes,), jnp.float32)

    s1 = g1 / jnp.sqrt(v1 + eps)
    bias1 = b1 - m1 * s1
    s2 = g2 / jnp.sqrt(v2 + eps)
    bias2 = b2 - m2 * s2
    return dict(w1=w1, s1=s1, b1=bias1, w2=w2, s2=s2, b2=bias2)


def _ref_forward(x_nchw, w1, s1, b1, w2, s2, b2):
    """Pure-JAX f32 reference (lax.conv) for correctness check."""
    x = jnp.transpose(x_nchw, (0, 2, 3, 1))
    dn = lax.conv_dimension_numbers(x.shape, w1.shape, ("NHWC", "HWIO", "NHWC"))

    def conv(y, w):
        return lax.conv_general_dilated(y, w, (1, 1), "SAME", dimension_numbers=dn)

    o = jnp.maximum(conv(x, w1) * s1 + b1, 0.0)
    o = conv(o, w2) * s2 + b2 + x
    o = jnp.maximum(o, 0.0)
    return jnp.transpose(o, (0, 3, 1, 2))


if __name__ == "__main__":
    N, C, H, W = 2, 4, 16, 16  # inplanes = planes = 4
    key = jax.random.PRNGKey(0)
    kx, kp = jax.random.split(key)
    x = jax.random.normal(kx, (N, C, H, W), jnp.float32)
    params = init_basic_block_params(kp, inplanes=C, planes=C)

    out = basic_block_forward(x, params["w1"], params["s1"], params["b1"],
                              params["w2"], params["s2"], params["b2"])
    out = jax.block_until_ready(out)

    ref = _ref_forward(x, params["w1"], params["s1"], params["b1"],
                       params["w2"], params["s2"], params["b2"])
    assert out.shape == (N, C, H, W)
    # bf16 matmul inputs with f32 accumulation -> loosened tolerance.
    assert jnp.allclose(out, ref, rtol=5e-2, atol=5e-2), (
        "mismatch vs reference, max abs err = %f" % float(jnp.max(jnp.abs(out - ref))))

    print("KERNEL_OK")
</pallas_src>

<mosaic_0001>
module attributes {stable_mosaic.version = 11 : i64} {
  func.func @kernel(%arg0: i32, %arg1: i32, %arg2: memref<1x16x16x4xf32, #tpu.memory_space<vmem>>, %arg3: memref<36x4xbf16, #tpu.memory_space<vmem>>, %arg4: memref<1x4xf32, #tpu.memory_space<vmem>>, %arg5: memref<36x4xbf16, #tpu.memory_space<vmem>>, %arg6: memref<1x4xf32, #tpu.memory_space<vmem>>, %arg7: memref<1x4x128xf32, #tpu.memory_space<vmem>>, %arg8: memref<20x18x4xbf16, #tpu.memory_space<vmem>>, %arg9: memref<10x18x4xbf16, #tpu.memory_space<vmem>>) attributes {dimension_semantics = [#tpu.dimension_semantics<parallel>, #tpu.dimension_semantics<arbitrary>], iteration_bounds = array<i64: 2, 2>, scalar_prefetch = 0 : i64, scratch_operands = 2 : i64, tpu.core_type = #tpu.core_type<tc>, window_params = [{transform_indices = @transform_0, window_bounds = array<i64: 1, 16, 16, 4>}, {pipeline_mode = #tpu.pipeline_mode<synchronous>, transform_indices = @transform_1, window_bounds = array<i64: 36, 4>}, {pipeline_mode = #tpu.pipeline_mode<synchronous>, transform_indices = @transform_2, window_bounds = array<i64: 1, 4>}, {pipeline_mode = #tpu.pipeline_mode<synchronous>, transform_indices = @transform_3, window_bounds = array<i64: 36, 4>}, {pipeline_mode = #tpu.pipeline_mode<synchronous>, transform_indices = @transform_4, window_bounds = array<i64: 1, 4>}, {transform_indices = @transform_5, window_bounds = array<i64: 1, 4, 128>}]} {
    %c8_i32 = arith.constant 8 : i32
    %0 = arith.muli %arg1, %c8_i32 : i32
    %1 = tpu.assume_multiple %0, 8 : i32
    %c0_i32 = arith.constant 0 : i32
    %2 = arith.cmpi eq, %arg1, %c0_i32 : i32
    %3 = arith.extui %2 : i1 to i32
    %c0_i32_0 = arith.constant 0 : i32
    %4 = arith.cmpi ne, %3, %c0_i32_0 : i32
    scf.if %4 {
      %cst_27 = arith.constant 0.000000e+00 : bf16
      %62 = vector.broadcast %cst_27 : bf16 to vector<20x18x4xbf16>
      %c0_28 = arith.constant 0 : index
      %c0_29 = arith.constant 0 : index
      %c0_30 = arith.constant 0 : index
      %63 = vector.load %arg8[%c0_28, %c0_29, %c0_30] : memref<20x18x4xbf16, #tpu.memory_space<vmem>>, vector<20x18x4xbf16>
      tpu.vector_store %arg8[%c0_28, %c0_29, %c0_30], %62 {strides = array<i32>} : memref<20x18x4xbf16, #tpu.memory_space<vmem>>, vector<20x18x4xbf16>,
      %cst_31 = arith.constant 0.000000e+00 : bf16
      %64 = vector.broadcast %cst_31 : bf16 to vector<10x18x4xbf16>
      %c0_32 = arith.constant 0 : index
      %c0_33 = arith.constant 0 : index
      %c0_34 = arith.constant 0 : index
      %65 = vector.load %arg9[%c0_32, %c0_33, %c0_34] : memref<10x18x4xbf16, #tpu.memory_space<vmem>>, vector<10x18x4xbf16>
      tpu.vector_store %arg9[%c0_32, %c0_33, %c0_34], %64 {strides = array<i32>} : memref<10x18x4xbf16, #tpu.memory_space<vmem>>, vector<10x18x4xbf16>,
      %c0_35 = arith.constant 0 : index
      %c0_36 = arith.constant 0 : index
      %c0_37 = arith.constant 0 : index
      %c0_38 = arith.constant 0 : index
      %66 = vector.load %arg2[%c0_35, %c0_36, %c0_37, %c0_38] : memref<1x16x16x4xf32, #tpu.memory_space<vmem>>, vector<1x16x16x4xf32>
      %67 = vector.shape_cast %66 : vector<1x16x16x4xf32> to vector<16x16x4xf32>
      %68 = arith.truncf %67 : vector<16x16x4xf32> to vector<16x16x4xbf16>
      %c2 = arith.constant 2 : index
      %c1_39 = arith.constant 1 : index
      %c0_40 = arith.constant 0 : index
      %69 = vector.load %arg8[%c2, %c1_39, %c0_40] : memref<20x18x4xbf16, #tpu.memory_space<vmem>>, vector<16x16x4xbf16>
      tpu.vector_store %arg8[%c2, %c1_39, %c0_40], %68 {strides = array<i32>} : memref<20x18x4xbf16, #tpu.memory_space<vmem>>, vector<16x16x4xbf16>,
    } else {
    }
    %5 = arith.index_cast %1 : i32 to index
    %c0 = arith.constant 0 : index
    %c0_1 = arith.constant 0 : index
    %6 = vector.load %arg8[%5, %c0, %c0_1] : memref<20x18x4xbf16, #tpu.memory_space<vmem>>, vector<12x18x4xbf16>
    %7 = vector.extract_strided_slice %6 {offsets = [0, 0, 0], sizes = [10, 16, 4], strides = [1, 1, 1]} : vector<12x18x4xbf16> to vector<10x16x4xbf16>
    %8 = vector.extract_strided_slice %6 {offsets = [0, 1, 0], sizes = [10, 16, 4], strides = [1, 1, 1]} : vector<12x18x4xbf16> to vector<10x16x4xbf16>
    %9 = vector.extract_strided_slice %6 {offsets = [0, 2, 0], sizes = [10, 16, 4], strides = [1, 1, 1]} : vector<12x18x4xbf16> to vector<10x16x4xbf16>
    %10 = vector.extract_strided_slice %6 {offsets = [1, 0, 0], sizes = [10, 16, 4], strides = [1, 1, 1]} : vector<12x18x4xbf16> to vector<10x16x4xbf16>
    %11 = vector.extract_strided_slice %6 {offsets = [1, 1, 0], sizes = [10, 16, 4], strides = [1, 1, 1]} : vector<12x18x4xbf16> to vector<10x16x4xbf16>
    %12 = vector.extract_strided_slice %6 {offsets = [1, 2, 0], sizes = [10, 16, 4], strides = [1, 1, 1]} : vector<12x18x4xbf16> to vector<10x16x4xbf16>
    %13 = vector.extract_strided_slice %6 {offsets = [2, 0, 0], sizes = [10, 16, 4], strides = [1, 1, 1]} : vector<12x18x4xbf16> to vector<10x16x4xbf16>
    %14 = vector.extract_strided_slice %6 {offsets = [2, 1, 0], sizes = [10, 16, 4], strides = [1, 1, 1]} : vector<12x18x4xbf16> to vector<10x16x4xbf16>
    %15 = vector.extract_strided_slice %6 {offsets = [2, 2, 0], sizes = [10, 16, 4], strides = [1, 1, 1]} : vector<12x18x4xbf16> to vector<10x16x4xbf16>
    %16 = tpu.concatenate %7, %8, %9, %10, %11, %12, %13, %14, %15 in 2 : vector<10x16x4xbf16>, vector<10x16x4xbf16>, vector<10x16x4xbf16>, vector<10x16x4xbf16>, vector<10x16x4xbf16>, vector<10x16x4xbf16>, vector<10x16x4xbf16>, vector<10x16x4xbf16>, vector<10x16x4xbf16> -> vector<10x16x36xbf16>
    %17 = vector.shape_cast %16 : vector<10x16x36xbf16> to vector<160x36xbf16>
    %c0_2 = arith.constant 0 : index
    %c0_3 = arith.constant 0 : index
    %18 = vector.load %arg3[%c0_2, %c0_3] : memref<36x4xbf16, #tpu.memory_space<vmem>>, vector<36x4xbf16>
    %cst = arith.constant dense<0.000000e+00> : vector<160x4xf32>
    %19 = tpu.matmul %17, %18, %cst {dimension_numbers = #tpu.dot_dimension_numbers<[1], [0], [0], [1], [0, 0, 1, 1], [], []>} : vector<160x36xbf16>, vector<36x4xbf16>, vector<160x4xf32> -> vector<160x4xf32>
    %c0_4 = arith.constant 0 : index
    %c0_5 = arith.constant 0 : index
    %20 = vector.load %arg4[%c0_4, %c0_5] : memref<1x4xf32, #tpu.memory_space<vmem>>, vector<1x4xf32>
    %21 = vector.broadcast %20 : vector<1x4xf32> to vector<160x4xf32>
    %22 = arith.addf %19, %21 : vector<160x4xf32>
    %cst_6 = arith.constant 0.000000e+00 : f32
    %23 = vector.broadcast %cst_6 : f32 to vector<160x4xf32>
    %24 = arith.maximumf %22, %23 : vector<160x4xf32>
    %25 = vector.shape_cast %24 : vector<160x4xf32> to vector<10x16x4xf32>
    %26 = arith.truncf %25 : vector<10x16x4xf32> to vector<10x16x4xbf16>
    %c0_7 = arith.constant 0 : index
    %c1 = arith.constant 1 : index
    %c0_8 = arith.constant 0 : index
    %27 = vector.load %arg9[%c0_7, %c1, %c0_8] : memref<10x18x4xbf16, #tpu.memory_space<vmem>>, vector<10x16x4xbf16>
    tpu.vector_store %arg9[%c0_7, %c1, %c0_8], %26 {strides = array<i32>} : memref<10x18x4xbf16, #tpu.memory_space<vmem>>, vector<10x16x4xbf16>,
    %c0_i32_9 = arith.constant 0 : i32
    %28 = arith.cmpi eq, %arg1, %c0_i32_9 : i32
    %29 = arith.extui %28 : i1 to i32
    %c0_i32_10 = arith.constant 0 : i32
    %30 = arith.cmpi ne, %29, %c0_i32_10 : i32
    scf.if %30 {
      %cst_27 = arith.constant 0.000000e+00 : bf16
      %62 = vector.broadcast %cst_27 : bf16 to vector<1x18x4xbf16>
      %c0_28 = arith.constant 0 : index
      %c0_29 = arith.constant 0 : index
      %c0_30 = arith.constant 0 : index
      %63 = vector.load %arg9[%c0_28, %c0_29, %c0_30] : memref<10x18x4xbf16, #tpu.memory_space<vmem>>, vector<1x18x4xbf16>
      tpu.vector_store %arg9[%c0_28, %c0_29, %c0_30], %62 {strides = array<i32>} : memref<10x18x4xbf16, #tpu.memory_space<vmem>>, vector<1x18x4xbf16>,
    } else {
    }
    %c1_i32 = arith.constant 1 : i32
    %31 = arith.cmpi eq, %arg1, %c1_i32 : i32
    %32 = arith.extui %31 : i1 to i32
    %c0_i32_11 = arith.constant 0 : i32
    %33 = arith.cmpi ne, %32, %c0_i32_11 : i32
    scf.if %33 {
      %cst_27 = arith.constant 0.000000e+00 : bf16
      %62 = vector.broadcast %cst_27 : bf16 to vector<1x18x4xbf16>
      %c9 = arith.constant 9 : index
      %c0_28 = arith.constant 0 : index
      %c0_29 = arith.constant 0 : index
      %63 = vector.load %arg9[%c9, %c0_28, %c0_29] : memref<10x18x4xbf16, #tpu.memory_space<vmem>>, vector<1x18x4xbf16>
      tpu.vector_store %arg9[%c9, %c0_28, %c0_29], %62 {strides = array<i32>} : memref<10x18x4xbf16, #tpu.memory_space<vmem>>, vector<1x18x4xbf16>,
    } else {
    }
    %c0_12 = arith.constant 0 : index
    %c0_13 = arith.constant 0 : index
    %c0_14 = arith.constant 0 : index
    %34 = vector.load %arg9[%c0_12, %c0_13, %c0_14] : memref<10x18x4xbf16, #tpu.memory_space<vmem>>, vector<10x18x4xbf16>
    %35 = vector.extract_strided_slice %34 {offsets = [0, 0, 0], sizes = [8, 16, 4], strides = [1, 1, 1]} : vector<10x18x4xbf16> to vector<8x16x4xbf16>
    %36 = vector.extract_strided_slice %34 {offsets = [0, 1, 0], sizes = [8, 16, 4], strides = [1, 1, 1]} : vector<10x18x4xbf16> to vector<8x16x4xbf16>
    %37 = vector.extract_strided_slice %34 {offsets = [0, 2, 0], sizes = [8, 16, 4], strides = [1, 1, 1]} : vector<10x18x4xbf16> to vector<8x16x4xbf16>
    %38 = vector.extract_strided_slice %34 {offsets = [1, 0, 0], sizes = [8, 16, 4], strides = [1, 1, 1]} : vector<10x18x4xbf16> to vector<8x16x4xbf16>
    %39 = vector.extract_strided_slice %34 {offsets = [1, 1, 0], sizes = [8, 16, 4], strides = [1, 1, 1]} : vector<10x18x4xbf16> to vector<8x16x4xbf16>
    %40 = vector.extract_strided_slice %34 {offsets = [1, 2, 0], sizes = [8, 16, 4], strides = [1, 1, 1]} : vector<10x18x4xbf16> to vector<8x16x4xbf16>
    %41 = vector.extract_strided_slice %34 {offsets = [2, 0, 0], sizes = [8, 16, 4], strides = [1, 1, 1]} : vector<10x18x4xbf16> to vector<8x16x4xbf16>
    %42 = vector.extract_strided_slice %34 {offsets = [2, 1, 0], sizes = [8, 16, 4], strides = [1, 1, 1]} : vector<10x18x4xbf16> to vector<8x16x4xbf16>
    %43 = vector.extract_strided_slice %34 {offsets = [2, 2, 0], sizes = [8, 16, 4], strides = [1, 1, 1]} : vector<10x18x4xbf16> to vector<8x16x4xbf16>
    %44 = tpu.concatenate %35, %36, %37, %38, %39, %40, %41, %42, %43 in 2 : vector<8x16x4xbf16>, vector<8x16x4xbf16>, vector<8x16x4xbf16>, vector<8x16x4xbf16>, vector<8x16x4xbf16>, vector<8x16x4xbf16>, vector<8x16x4xbf16>, vector<8x16x4xbf16>, vector<8x16x4xbf16> -> vector<8x16x36xbf16>
    %45 = vector.shape_cast %44 : vector<8x16x36xbf16> to vector<128x36xbf16>
    %c0_15 = arith.constant 0 : index
    %c0_16 = arith.constant 0 : index
    %46 = vector.load %arg5[%c0_15, %c0_16] : memref<36x4xbf16, #tpu.memory_space<vmem>>, vector<36x4xbf16>
    %cst_17 = arith.constant dense<0.000000e+00> : vector<128x4xf32>
    %47 = tpu.matmul %45, %46, %cst_17 {dimension_numbers = #tpu.dot_dimension_numbers<[1], [0], [0], [1], [0, 0, 1, 1], [], []>} : vector<128x36xbf16>, vector<36x4xbf16>, vector<128x4xf32> -> vector<128x4xf32>
    %c0_18 = arith.constant 0 : index
    %c0_19 = arith.constant 0 : index
    %48 = vector.load %arg6[%c0_18, %c0_19] : memref<1x4xf32, #tpu.memory_space<vmem>>, vector<1x4xf32>
    %49 = vector.broadcast %48 : vector<1x4xf32> to vector<128x4xf32>
    %50 = arith.addf %47, %49 : vector<128x4xf32>
    %c0_20 = arith.constant 0 : index
    %51 = arith.index_cast %1 : i32 to index
    %c0_21 = arith.constant 0 : index
    %c0_22 = arith.constant 0 : index
    %52 = vector.load %arg2[%c0_20, %51, %c0_21, %c0_22] : memref<1x16x16x4xf32, #tpu.memory_space<vmem>>, vector<1x8x16x4xf32>
    %53 = vector.shape_cast %52 : vector<1x8x16x4xf32> to vector<8x16x4xf32>
    %54 = vector.shape_cast %53 : vector<8x16x4xf32> to vector<128x4xf32>
    %55 = arith.addf %50, %54 : vector<128x4xf32>
    %cst_23 = arith.constant 0.000000e+00 : f32
    %56 = vector.broadcast %cst_23 : f32 to vector<128x4xf32>
    %57 = arith.maximumf %55, %56 : vector<128x4xf32>
    %58 = tpu.transpose %57, [1, 0] : vector<128x4xf32> -> vector<4x128xf32>
    %c0_24 = arith.constant 0 : index
    %c0_25 = arith.constant 0 : index
    %c0_26 = arith.constant 0 : index
    %59 = vector.load %arg7[%c0_24, %c0_25, %c0_26] : memref<1x4x128xf32, #tpu.memory_space<vmem>>, vector<1x4x128xf32>
    %60 = vector.shape_cast %59 : vector<1x4x128xf32> to vector<4x128xf32>
    %61 = vector.shape_cast %58 : vector<4x128xf32> to vector<1x4x128xf32>
    tpu.vector_store %arg7[%c0_24, %c0_25, %c0_26], %61 {strides = array<i32>} : memref<1x4x128xf32, #tpu.memory_space<vmem>>, vector<1x4x128xf32>,
    return
  }
  func.func @transform_0(%arg0: i32, %arg1: i32) -> (i32, i32, i32, i32) {
    %c0_i32 = arith.constant 0 : i32
    %c0_i32_0 = arith.constant 0 : i32
    %c0_i32_1 = arith.constant 0 : i32
    %c0_i32_2 = arith.constant 0 : i32
    return %arg0, %c0_i32, %c0_i32_0, %c0_i32_1 : i32, i32, i32, i32
  }
  func.func @transform_1(%arg0: i32, %arg1: i32) -> (i32, i32) {
    %c0_i32 = arith.constant 0 : i32
    %c0_i32_0 = arith.constant 0 : i32
    %c0_i32_1 = arith.constant 0 : i32
    return %c0_i32, %c0_i32_0 : i32, i32
  }
  func.func @transform_2(%arg0: i32, %arg1: i32) -> (i32, i32) {
    %c0_i32 = arith.constant 0 : i32
    %c0_i32_0 = arith.constant 0 : i32
    %c0_i32_1 = arith.constant 0 : i32
    return %c0_i32, %c0_i32_0 : i32, i32
  }
  func.func @transform_3(%arg0: i32, %arg1: i32) -> (i32, i32) {
    %c0_i32 = arith.constant 0 : i32
    %c0_i32_0 = arith.constant 0 : i32
    %c0_i32_1 = arith.constant 0 : i32
    return %c0_i32, %c0_i32_0 : i32, i32
  }
  func.func @transform_4(%arg0: i32, %arg1: i32) -> (i32, i32) {
    %c0_i32 = arith.constant 0 : i32
    %c0_i32_0 = arith.constant 0 : i32
    %c0_i32_1 = arith.constant 0 : i32
    return %c0_i32, %c0_i32_0 : i32, i32
  }
  func.func @transform_5(%arg0: i32, %arg1: i32) -> (i32, i32, i32) {
    %c0_i32 = arith.constant 0 : i32
    %c0_i32_0 = arith.constant 0 : i32
    return %arg0, %c0_i32, %arg1 : i32, i32, i32
  }
}

</mosaic_0001>

<llo_original>
// kernel: basic_block_forward.1
$region0: #{basic_block_forward.1}
  #allocation0 [shape = 'u32[]', space=smem, size = 0x4, offset = 0x4, fixed_abs, tag = 'smem constant byte address 0x4 - core index']
  #allocation1 [shape = 'u32[72,128]{1,0:T(1,128)}', space=vmem, size = 0x9000, scoped, tag = 'internal scratch']
  #allocation2 [shape = 'bf16[20,18,4]{2,1,0:T(8,128)(2,1)}', space=vmem, size = 0x1e000, scoped, tag = 'scratch operand']
  #allocation3 [shape = 'bf16[10,18,4]{2,1,0:T(8,128)(2,1)}', space=vmem, size = 0xf000, scoped, tag = 'scratch operand']
  %s0 = inlined_call_operand.vmem [shape: f32[2,16,16,4], index: 0, kind: input, shape index: {}]
  %s1 = inlined_call_operand.vmem [shape: bf16[36,4], index: 1, kind: input, shape index: {}]
  %s2 = inlined_call_operand.vmem [shape: f32[1,4], index: 2, kind: input, shape index: {}]
  %s3 = inlined_call_operand.vmem [shape: bf16[36,4], index: 3, kind: input, shape index: {}]
  %s4 = inlined_call_operand.vmem [shape: f32[1,4], index: 4, kind: input, shape index: {}]
  %s5 = inlined_call_operand.vmem [shape: f32[2,4,256], index: 5, kind: output, shape index: {}]
  %s6 = sld [smem:[#allocation0]]
  $region65: #{basic_block_forward.1} parent=0
    _
  %s8 = ssub.s32 1, %s6
  %s9 = scalar_select 0, %s8, %s6
  loop: start=0, step=1, limit=6
  $region2: #{basic_block_forward.1} parent=0 // loop_pre_header
    _
  $region3: #{basic_block_forward.1} parent=0 // loop_header
    %s11 = sphi 0, %s15
    %p12 = scmp.ge.s32.totalorder %s11, 6
    %s18 = sphi 0, %s30
    %s19 = sphi 0, %s26
    %s20 = sphi 0, %s18
    %s21 = sphi 0, %s19
    %s22 = sphi 0, %s20
    %s23 = sphi 0, %s21
    %s33 = sphi 0, %s35
    %s36 = sphi 0, %s33
    %s37 = sphi 0, %s36
    %s53 = sphi 0, %s37
    %s57 = sphi 0, %s57
    %s59 = sphi 0, %s57
    %s60 = sphi 0, %s59
    %s74 = sphi 0, %s60
    %s78 = sphi 0, %s78
    %s80 = sphi 0, %s78
    %s81 = sphi 0, %s80
    %s95 = sphi 0, %s81
    %s99 = sphi 0, %s99
    %s101 = sphi 0, %s99
    %s102 = sphi 0, %s101
    %s116 = sphi 0, %s102
    %s120 = sphi 0, %s120
    %s122 = sphi 0, %s120
    %s123 = sphi 0, %s122
    %s137 = sphi 0, %s123
    %s145 = sphi 0, %s147
    %s148 = sphi 0, %s145
    %s149 = sphi 0, %s148
    %s165 = sphi 0, %s149
  $region4: #{basic_block_forward.1} parent=0 // loop_header_branch
    %14 = sbr.rel (%p12) target = $region8
  $region5: #{basic_block_forward.1} parent=0 // loop_body
    %s16 = ssub.s32 %s11, 1
    %s17 = ssub.s32 %s11, 2
    %s24 = sadd.s32 1, %s19
    %p25 = scmp.ge.s32.totalorder %s24, 2
    %s26 = scalar_select %p25, 0, %s24
    %s27 = sadd.s32 1, %s18
    %s28 = scalar_select %p25, %s27, %s18
    %p29 = scmp.ge.s32.totalorder %s28, 2
    %s30 = scalar_select %p29, 0, %s28
    %s31 = ssub.s32 %s18, %s30
    %p32 = scmp.eq.s32.totalorder %s31, 0
    %s34 = sadd.s32 %s33, 1
    %s35 = scalar_select %p32, %s33, %s34
    %p38 = pneg %p32
    %p39 = scmp.eq.s32.totalorder %s11, 3
    %p40 = por %p38, %p39
    %p41 = scmp.ne.s32.totalorder %s33, %s36
    %p42 = scmp.eq.s32.totalorder %s11, 0
    %p43 = por %p41, %p42
    %p44 = scmp.ne.s32.totalorder %s33, %s36
    %p45 = scmp.eq.s32.totalorder %s16, 3
    %p46 = por %p44, %p45
    %p47 = scmp.ne.s32.totalorder %s36, %s37
    %p48 = scmp.eq.s32.totalorder %s16, 0
    %p49 = por %p47, %p48
    %p50 = scmp.ne.s32.totalorder %s36, %s37
    %p51 = scmp.eq.s32.totalorder %s17, 3
    %p52 = por %p50, %p51
    %p54 = scmp.ne.s32.totalorder %s37, %s53
    %p55 = scmp.eq.s32.totalorder %s17, 0
    %p56 = por %p54, %p55
    %s58 = sadd.s32 %s57, 1
    %p61 = scmp.eq.s32.totalorder %s11, 3
    %p62 = scmp.ne.s32.totalorder %s57, %s59
    %p63 = scmp.eq.s32.totalorder %s11, 0
    %p64 = por %p62, %p63
    %p65 = scmp.ne.s32.totalorder %s57, %s59
    %p66 = scmp.eq.s32.totalorder %s16, 3
    %p67 = por %p65, %p66
    %p68 = scmp.ne.s32.totalorder %s59, %s60
    %p69 = scmp.eq.s32.totalorder %s16, 0
    %p70 = por %p68, %p69
    %p71 = scmp.ne.s32.totalorder %s59, %s60
    %p72 = scmp.eq.s32.totalorder %s17, 3
    %p73 = por %p71, %p72
    %p75 = scmp.ne.s32.totalorder %s60, %s74
    %p76 = scmp.eq.s32.totalorder %s17, 0
    %p77 = por %p75, %p76
    %s79 = sadd.s32 %s78, 1
    %p82 = scmp.eq.s32.totalorder %s11, 3
    %p83 = scmp.ne.s32.totalorder %s78, %s80
    %p84 = scmp.eq.s32.totalorder %s11, 0
    %p85 = por %p83, %p84
    %p86 = scmp.ne.s32.totalorder %s78, %s80
    %p87 = scmp.eq.s32.totalorder %s16, 3
    %p88 = por %p86, %p87
    %p89 = scmp.ne.s32.totalorder %s80, %s81
    %p90 = scmp.eq.s32.totalorder %s16, 0
    %p91 = por %p89, %p90
    %p92 = scmp.ne.s32.totalorder %s80, %s81
    %p93 = scmp.eq.s32.totalorder %s17, 3
    %p94 = por %p92, %p93
    %p96 = scmp.ne.s32.totalorder %s81, %s95
    %p97 = scmp.eq.s32.totalorder %s17, 0
    %p98 = por %p96, %p97
    %s100 = sadd.s32 %s99, 1
    %p103 = scmp.eq.s32.totalorder %s11, 3
    %p104 = scmp.ne.s32.totalorder %s99, %s101
    %p105 = scmp.eq.s32.totalorder %s11, 0
    %p106 = por %p104, %p105
    %p107 = scmp.ne.s32.totalorder %s99, %s101
    %p108 = scmp.eq.s32.totalorder %s16, 3
    %p109 = por %p107, %p108
    %p110 = scmp.ne.s32.totalorder %s101, %s102
    %p111 = scmp.eq.s32.totalorder %s16, 0
    %p112 = por %p110, %p111
    %p113 = scmp.ne.s32.totalorder %s101, %s102
    %p114 = scmp.eq.s32.totalorder %s17, 3
    %p115 = por %p113, %p114
    %p117 = scmp.ne.s32.totalorder %s102, %s116
    %p118 = scmp.eq.s32.totalorder %s17, 0
    %p119 = por %p117, %p118
    %s121 = sadd.s32 %s120, 1
    %p124 = scmp.eq.s32.totalorder %s11, 3
    %p125 = scmp.ne.s32.totalorder %s120, %s122
    %p126 = scmp.eq.s32.totalorder %s11, 0
    %p127 = por %p125, %p126
    %p128 = scmp.ne.s32.totalorder %s120, %s122
    %p129 = scmp.eq.s32.totalorder %s16, 3
    %p130 = por %p128, %p129
    %p131 = scmp.ne.s32.totalorder %s122, %s123
    %p132 = scmp.eq.s32.totalorder %s16, 0
    %p133 = por %p131, %p132
    %p134 = scmp.ne.s32.totalorder %s122, %s123
    %p135 = scmp.eq.s32.totalorder %s17, 3
    %p136 = por %p134, %p135
    %p138 = scmp.ne.s32.totalorder %s123, %s137
    %p139 = scmp.eq.s32.totalorder %s17, 0
    %p140 = por %p138, %p139
    %s141 = ssub.s32 %s18, %s30
    %s142 = ssub.s32 %s19, %s26
    %s143 = sor.u32 %s141, %s142
    %p144 = scmp.eq.s32.totalorder %s143, 0
    %s146 = sadd.s32 %s145, 1
    %s147 = scalar_select %p144, %s145, %s146
    %p150 = pneg %p144
    %p151 = scmp.eq.s32.totalorder %s11, 3
    %p152 = por %p150, %p151
    %p153 = scmp.ne.s32.totalorder %s145, %s148
    %p154 = scmp.eq.s32.totalorder %s11, 0
    %p155 = por %p153, %p154
    %p156 = scmp.ne.s32.totalorder %s145, %s148
    %p157 = scmp.eq.s32.totalorder %s16, 3
    %p158 = por %p156, %p157
    %p159 = scmp.ne.s32.totalorder %s148, %s149
    %p160 = scmp.eq.s32.totalorder %s16, 0
    %p161 = por %p159, %p160
    %p162 = scmp.ne.s32.totalorder %s148, %s149
    %p163 = scmp.eq.s32.totalorder %s17, 3
    %p164 = por %p162, %p163
    %p166 = scmp.ne.s32.totalorder %s149, %s165
    %p167 = scmp.eq.s32.totalorder %s17, 0
    %p168 = por %p166, %p167
    %p169 = scmp.le.s32.totalorder 1, %s11
    %p170 = scmp.lt.s32.totalorder %s11, 5
    %p171 = pnand %p169, %p170
    %p172 = pneg %p171
    // Predicated region
    $region9: #{basic_block_forward.1} parent=5 // pred_check
      _
    $region10: #{basic_block_forward.1} parent=5 // pred_check_branch
      %174 = sbr.rel (%p171) target = $region12
    $region11: #{basic_block_forward.1} parent=5 // pred_region
      %s175 = ssub.s32 %s11, 1
      // Predicated region
      $region13: #{basic_block_forward.1} parent=11 // pred_check
        %p176 = pneg %p70
      $region14: #{basic_block_forward.1} parent=11 // pred_check_branch
        %178 = sbr.rel (%p176) target = $region16
      $region15: #{basic_block_forward.1} parent=11 // pred_region
        _
      $region16: #{basic_block_forward.1} parent=11 // pred_fallthru
        _
      // Predicated region
      $region17: #{basic_block_forward.1} parent=11 // pred_check
        %p179 = pneg %p91
      $region18: #{basic_block_forward.1} parent=11 // pred_check_branch
        %181 = sbr.rel (%p179) target = $region20
      $region19: #{basic_block_forward.1} parent=11 // pred_region
        _
      $region20: #{basic_block_forward.1} parent=11 // pred_fallthru
        _
      // Predicated region
      $region21: #{basic_block_forward.1} parent=11 // pred_check
        %p182 = pneg %p112
      $region22: #{basic_block_forward.1} parent=11 // pred_check_branch
        %184 = sbr.rel (%p182) target = $region24
      $region23: #{basic_block_forward.1} parent=11 // pred_region
        _
      $region24: #{basic_block_forward.1} parent=11 // pred_fallthru
        _
      // Predicated region
      $region25: #{basic_block_forward.1} parent=11 // pred_check
        %p185 = pneg %p133
      $region26: #{basic_block_forward.1} parent=11 // pred_check_branch
        %187 = sbr.rel (%p185) target = $region28
      $region27: #{basic_block_forward.1} parent=11 // pred_region
        _
      $region28: #{basic_block_forward.1} parent=11 // pred_fallthru
        _
    $region12: #{basic_block_forward.1} parent=5 // pred_fallthru
      _
    %p188 = scmp.lt.s32.totalorder %s11, 4
    // Predicated region
    $region29: #{basic_block_forward.1} parent=5 // pred_check
      %p189 = pneg %p188
    $region30: #{basic_block_forward.1} parent=5 // pred_check_branch
      %191 = sbr.rel (%p189) target = $region32
    $region31: #{basic_block_forward.1} parent=5 // pred_region
      // Predicated region
      $region33: #{basic_block_forward.1} parent=31 // pred_check
        %p192 = pneg %p43
      $region34: #{basic_block_forward.1} parent=31 // pred_check_branch
        %194 = sbr.rel (%p192) target = $region36
      $region35: #{basic_block_forward.1} parent=31 // pred_region
        %p195 = scmp.lt.s32.totalorder %s18, 1
        %s196 = scalar_select %p195, %s18, 1
        %s197 = smul.addr %s196, 32
        %s198 = smul.addr %s197, 8
        %s199 = scalar_lea.vmem %s0, %s198
      $region36: #{basic_block_forward.1} parent=31 // pred_fallthru
        _
    $region32: #{basic_block_forward.1} parent=5 // pred_fallthru
      _
    %p200 = scmp.le.s32.totalorder 1, %s11
    %p201 = scmp.lt.s32.totalorder %s11, 5
    %p202 = pnand %p200, %p201
    %p203 = pneg %p202
    // Predicated region
    $region37: #{basic_block_forward.1} parent=5 // pred_check
      _
    $region38: #{basic_block_forward.1} parent=5 // pred_check_branch
      %205 = sbr.rel (%p202) target = $region40
    $region39: #{basic_block_forward.1} parent=5 // pred_region
      %s206 = ssub.s32 %s11, 1
      %p207 = scmp.lt.s32.totalorder %s20, 1
      %s208 = scalar_select %p207, %s20, 1
      %s209 = smul.addr %s208, 32
      %s210 = smul.addr %s209, 8
      %s211 = scalar_lea.vmem %s0, %s210
      %p212 = pneg %p49
      %p213 = pneg %p46
      %p214 = pneg %p70
      %p215 = pneg %p67
      %p216 = pneg %p91
      %p217 = pneg %p88
      %p218 = pneg %p112
      %p219 = pneg %p109
      %p220 = pneg %p133
      %p221 = pneg %p130
      %p222 = pneg %p161
      %p223 = pneg %p158
      %p224 = scmp.lt.s32.totalorder %s20, 1
      %s225 = scalar_select %p224, %s20, 1
      %p226 = scmp.lt.s32.totalorder %s21, 1
      %s227 = scalar_select %p226, %s21, 1
      %s228 = smul.addr %s225, 2
      %s229 = sadd.s32 %s227, %s228
      %s230 = smul.addr %s229, 4
      %s231 = scalar_lea.vmem %s5, %s230
      %p232 = scmp.lt.s32.totalorder %s20, 1
      %s233 = scalar_select %p232, %s20, 1
      %s234 = smul.addr %s233, 32
      %s235 = smul.addr %s234, 8
      %s236 = scalar_lea.vmem %s0, %s235
      %p237 = scmp.lt.s32.totalorder %s20, 1
      %s238 = scalar_select %p237, %s20, 1
      %p239 = scmp.lt.s32.totalorder %s21, 1
      %s240 = scalar_select %p239, %s21, 1
      %s241 = smul.addr %s238, 2
      %s242 = sadd.s32 %s240, %s241
      %s243 = smul.addr %s242, 4
      %s244 = scalar_lea.vmem %s5, %s243
      %s246 = smul.u32 %s21, 8
      %p247 = scmp.eq.s32.totalorder %s21, 0
      // Predicated region
      $region41: #{basic_block_forward.1} parent=39 // pred_check
        %p248 = pneg %p247
      $region42: #{basic_block_forward.1} parent=39 // pred_check_branch
        %250 = sbr.rel (%p248) target = $region44
      $region43: #{basic_block_forward.1} parent=39 // pred_region
        %vm251 = vcmask 27648
        %252 = vst.msk [vmem:[#allocation2] sm:$0xf] %vm251, 0
        %253 = vst.msk [vmem:[#allocation2 + $0x4] sm:$0xf] %vm251, 0
        %vm254 = vcmask 24576
        %255 = vst.msk [vmem:[#allocation2 + $0x8] sm:$0x1] %vm254, 0
        %256 = vst.msk [vmem:[#allocation2 + $0xc] sm:$0xf] %vm251, 0
        %257 = vst.msk [vmem:[#allocation2 + $0x10] sm:$0xf] %vm251, 0
        %258 = vst.msk [vmem:[#allocation2 + $0x14] sm:$0x1] %vm254, 0
        %259 = vst.msk [vmem:[#allocation2 + $0x18] sm:$0xf] %vm251, 0
        %260 = vst.msk [vmem:[#allocation2 + $0x1c] sm:$0xf] %vm251, 0
        %261 = vst.msk [vmem:[#allocation2 + $0x20] sm:$0x1] %vm254, 0
        %262 = vst.msk [vmem:[#allocation2 + $0x24] sm:$0xf] %vm251, 0
        %263 = vst.msk [vmem:[#allocation2 + $0x28] sm:$0xf] %vm251, 0
        %264 = vst.msk [vmem:[#allocation2 + $0x2c] sm:$0x1] %vm254, 0
        %265 = vst.msk [vmem:[#allocation2 + $0x30] sm:$0xf] %vm251, 0
        %266 = vst.msk [vmem:[#allocation2 + $0x34] sm:$0xf] %vm251, 0
        %267 = vst.msk [vmem:[#allocation2 + $0x38] sm:$0x1] %vm254, 0
        %268 = vst.msk [vmem:[#allocation2 + $0x3c] sm:$0xf] %vm251, 0
        %269 = vst.msk [vmem:[#allocation2 + $0x40] sm:$0xf] %vm251, 0
        %270 = vst.msk [vmem:[#allocation2 + $0x44] sm:$0x1] %vm254, 0
        %271 = vst.msk [vmem:[#allocation2 + $0x48] sm:$0xf] %vm251, 0
        %272 = vst.msk [vmem:[#allocation2 + $0x4c] sm:$0xf] %vm251, 0
        %273 = vst.msk [vmem:[#allocation2 + $0x50] sm:$0x1] %vm254, 0
        %274 = vst.msk [vmem:[#allocation2 + $0x54] sm:$0xf] %vm251, 0
        %275 = vst.msk [vmem:[#allocation2 + $0x58] sm:$0xf] %vm251, 0
        %276 = vst.msk [vmem:[#allocation2 + $0x5c] sm:$0x1] %vm254, 0
        %277 = vst.msk [vmem:[#allocation2 + $0x60] sm:$0xf] %vm251, 0
        %278 = vst.msk [vmem:[#allocation2 + $0x64] sm:$0xf] %vm251, 0
        %279 = vst.msk [vmem:[#allocation2 + $0x68] sm:$0x1] %vm254, 0
        %280 = vst.msk [vmem:[#allocation2 + $0x6c] sm:$0xf] %vm251, 0
        %281 = vst.msk [vmem:[#allocation2 + $0x70] sm:$0xf] %vm251, 0
        %282 = vst.msk [vmem:[#allocation2 + $0x74] sm:$0x1] %vm254, 0
        %283 = vst.msk [vmem:[#allocation2 + $0x78] sm:$0xf] %vm251, 0
        %284 = vst.msk [vmem:[#allocation2 + $0x7c] sm:$0xf] %vm251, 0
        %285 = vst.msk [vmem:[#allocation2 + $0x80] sm:$0x1] %vm254, 0
        %286 = vst.msk [vmem:[#allocation2 + $0x84] sm:$0xf] %vm251, 0
        %287 = vst.msk [vmem:[#allocation2 + $0x88] sm:$0xf] %vm251, 0
        %288 = vst.msk [vmem:[#allocation2 + $0x8c] sm:$0x1] %vm254, 0
        %289 = vst.msk [vmem:[#allocation2 + $0x90] sm:$0xf] %vm251, 0
        %290 = vst.msk [vmem:[#allocation2 + $0x94] sm:$0xf] %vm251, 0
        %291 = vst.msk [vmem:[#allocation2 + $0x98] sm:$0x1] %vm254, 0
        %292 = vst.msk [vmem:[#allocation2 + $0x9c] sm:$0xf] %vm251, 0
        %293 = vst.msk [vmem:[#allocation2 + $0xa0] sm:$0xf] %vm251, 0
        %294 = vst.msk [vmem:[#allocation2 + $0xa4] sm:$0x1] %vm254, 0
        %295 = vst.msk [vmem:[#allocation2 + $0xa8] sm:$0xf] %vm251, 0
        %296 = vst.msk [vmem:[#allocation2 + $0xac] sm:$0xf] %vm251, 0
        %297 = vst.msk [vmem:[#allocation2 + $0xb0] sm:$0x1] %vm254, 0
        %298 = vst.msk [vmem:[#allocation2 + $0xb4] sm:$0xf] %vm251, 0
        %299 = vst.msk [vmem:[#allocation2 + $0xb8] sm:$0xf] %vm251, 0
        %300 = vst.msk [vmem:[#allocation2 + $0xbc] sm:$0x1] %vm254, 0
        %301 = vst.msk [vmem:[#allocation2 + $0xc0] sm:$0xf] %vm251, 0
        %302 = vst.msk [vmem:[#allocation2 + $0xc4] sm:$0xf] %vm251, 0
        %303 = vst.msk [vmem:[#allocation2 + $0xc8] sm:$0x1] %vm254, 0
        %304 = vst.msk [vmem:[#allocation2 + $0xcc] sm:$0xf] %vm251, 0
        %305 = vst.msk [vmem:[#allocation2 + $0xd0] sm:$0xf] %vm251, 0
        %306 = vst.msk [vmem:[#allocation2 + $0xd4] sm:$0x1] %vm254, 0
        %307 = vst.msk [vmem:[#allocation2 + $0xd8] sm:$0xf] %vm251, 0
        %308 = vst.msk [vmem:[#allocation2 + $0xdc] sm:$0xf] %vm251, 0
        %309 = vst.msk [vmem:[#allocation2 + $0xe0] sm:$0x1] %vm254, 0
        %310 = vst.msk [vmem:[#allocation2 + $0xe4] sm:$0xf] %vm251, 0
        %311 = vst.msk [vmem:[#allocation2 + $0xe8] sm:$0xf] %vm251, 0
        %312 = vst.msk [vmem:[#allocation2 + $0xec] sm:$0x1] %vm254, 0
        %313 = vst.msk [vmem:[#allocation3] sm:$0xf] %vm251, 0
        %314 = vst.msk [vmem:[#allocation3 + $0x4] sm:$0xf] %vm251, 0
        %315 = vst.msk [vmem:[#allocation3 + $0x8] sm:$0x1] %vm254, 0
        %316 = vst.msk [vmem:[#allocation3 + $0xc] sm:$0xf] %vm251, 0
        %317 = vst.msk [vmem:[#allocation3 + $0x10] sm:$0xf] %vm251, 0
        %318 = vst.msk [vmem:[#allocation3 + $0x14] sm:$0x1] %vm254, 0
        %319 = vst.msk [vmem:[#allocation3 + $0x18] sm:$0xf] %vm251, 0
        %320 = vst.msk [vmem:[#allocation3 + $0x1c] sm:$0xf] %vm251, 0
        %321 = vst.msk [vmem:[#allocation3 + $0x20] sm:$0x1] %vm254, 0
        %322 = vst.msk [vmem:[#allocation3 + $0x24] sm:$0xf] %vm251, 0
        %323 = vst.msk [vmem:[#allocation3 + $0x28] sm:$0xf] %vm251, 0
        %324 = vst.msk [vmem:[#allocation3 + $0x2c] sm:$0x1] %vm254, 0
        %325 = vst.msk [vmem:[#allocation3 + $0x30] sm:$0xf] %vm251, 0
        %326 = vst.msk [vmem:[#allocation3 + $0x34] sm:$0xf] %vm251, 0
        %327 = vst.msk [vmem:[#allocation3 + $0x38] sm:$0x1] %vm254, 0
        %328 = vst.msk [vmem:[#allocation3 + $0x3c] sm:$0xf] %vm251, 0
        %329 = vst.msk [vmem:[#allocation3 + $0x40] sm:$0xf] %vm251, 0
        %330 = vst.msk [vmem:[#allocation3 + $0x44] sm:$0x1] %vm254, 0
        %331 = vst.msk [vmem:[#allocation3 + $0x48] sm:$0xf] %vm251, 0
        %332 = vst.msk [vmem:[#allocation3 + $0x4c] sm:$0xf] %vm251, 0
        %333 = vst.msk [vmem:[#allocation3 + $0x50] sm:$0x1] %vm254, 0
        %334 = vst.msk [vmem:[#allocation3 + $0x54] sm:$0xf] %vm251, 0
        %335 = vst.msk [vmem:[#allocation3 + $0x58] sm:$0xf] %vm251, 0
        %336 = vst.msk [vmem:[#allocation3 + $0x5c] sm:$0x1] %vm254, 0
        %337 = vst.msk [vmem:[#allocation3 + $0x60] sm:$0xf] %vm251, 0
        %338 = vst.msk [vmem:[#allocation3 + $0x64] sm:$0xf] %vm251, 0
        %339 = vst.msk [vmem:[#allocation3 + $0x68] sm:$0x1] %vm254, 0
        %340 = vst.msk [vmem:[#allocation3 + $0x6c] sm:$0xf] %vm251, 0
        %341 = vst.msk [vmem:[#allocation3 + $0x70] sm:$0xf] %vm251, 0
        %342 = vst.msk [vmem:[#allocation3 + $0x74] sm:$0x1] %vm254, 0
        %v343 = vld [vmem:[%s236] sm:$0xff]
        %v344 = vld [vmem:[%s236 + $0x8] sm:$0xff]
        %v345 = vld [vmem:[%s236 + $0x10] sm:$0xff]
        %v346 = vld [vmem:[%s236 + $0x18] sm:$0xff]
        %v347 = vld [vmem:[%s236 + $0x20] sm:$0xff]
        %v348 = vld [vmem:[%s236 + $0x28] sm:$0xff]
        %v349 = vld [vmem:[%s236 + $0x30] sm:$0xff]
        %v350 = vld [vmem:[%s236 + $0x38] sm:$0xff]
        %v351 = vld [vmem:[%s236 + $0x40] sm:$0xff]
        %v352 = vld [vmem:[%s236 + $0x48] sm:$0xff]
        %v353 = vld [vmem:[%s236 + $0x50] sm:$0xff]
        %v354 = vld [vmem:[%s236 + $0x58] sm:$0xff]
        %v355 = vld [vmem:[%s236 + $0x60] sm:$0xff]
        %v356 = vld [vmem:[%s236 + $0x68] sm:$0xff]
        %v357 = vld [vmem:[%s236 + $0x70] sm:$0xff]
        %v358 = vld [vmem:[%s236 + $0x78] sm:$0xff]
        %v359 = vld [vmem:[%s236 + $0x80] sm:$0xff]
        %v360 = vld [vmem:[%s236 + $0x88] sm:$0xff]
        %v361 = vld [vmem:[%s236 + $0x90] sm:$0xff]
        %v362 = vld [vmem:[%s236 + $0x98] sm:$0xff]
        %v363 = vld [vmem:[%s236 + $0xa0] sm:$0xff]
        %v364 = vld [vmem:[%s236 + $0xa8] sm:$0xff]
        %v365 = vld [vmem:[%s236 + $0xb0] sm:$0xff]
        %v366 = vld [vmem:[%s236 + $0xb8] sm:$0xff]
        %v367 = vld [vmem:[%s236 + $0xc0] sm:$0xff]
        %v368 = vld [vmem:[%s236 + $0xc8] sm:$0xff]
        %v369 = vld [vmem:[%s236 + $0xd0] sm:$0xff]
        %v370 = vld [vmem:[%s236 + $0xd8] sm:$0xff]
        %v371 = vld [vmem:[%s236 + $0xe0] sm:$0xff]
        %v372 = vld [vmem:[%s236 + $0xe8] sm:$0xff]
        %v373 = vld [vmem:[%s236 + $0xf0] sm:$0xff]
        %v374 = vld [vmem:[%s236 + $0xf8] sm:$0xff]
        %v375 = vpack.c.bf16 %v343, %v343
        %v376 = vpack.c.bf16 %v344, %v344
        %v377 = vpack.c.bf16 %v345, %v345
        %v378 = vpack.c.bf16 %v346, %v346
        %v379 = vpack.c.bf16 %v347, %v347
        %v380 = vpack.c.bf16 %v348, %v348
        %v381 = vpack.c.bf16 %v349, %v349
        %v382 = vpack.c.bf16 %v350, %v350
        %v383 = vpack.c.bf16 %v351, %v351
        %v384 = vpack.c.bf16 %v352, %v352
        %v385 = vpack.c.bf16 %v353, %v353
        %v386 = vpack.c.bf16 %v354, %v354
        %v387 = vpack.c.bf16 %v355, %v355
        %v388 = vpack.c.bf16 %v356, %v356
        %v389 = vpack.c.bf16 %v357, %v357
        %v390 = vpack.c.bf16 %v358, %v358
        %v391 = vpack.c.bf16 %v359, %v359
        %v392 = vpack.c.bf16 %v360, %v360
        %v393 = vpack.c.bf16 %v361, %v361
        %v394 = vpack.c.bf16 %v362, %v362
        %v395 = vpack.c.bf16 %v363, %v363
        %v396 = vpack.c.bf16 %v364, %v364
        %v397 = vpack.c.bf16 %v365, %v365
        %v398 = vpack.c.bf16 %v366, %v366
        %v399 = vpack.c.bf16 %v367, %v367
        %v400 = vpack.c.bf16 %v368, %v368
        %v401 = vpack.c.bf16 %v369, %v369
        %v402 = vpack.c.bf16 %v370, %v370
        %v403 = vpack.c.bf16 %v371, %v371
        %v404 = vpack.c.bf16 %v372, %v372
        %v405 = vpack.c.bf16 %v373, %v373
        %v406 = vpack.c.bf16 %v374, %v374
        %vm407 = vsmask.f32 256
        %vm408 = vsmask.f32 4368
        %vm409 = vmor %vm407, %vm408
        %v411 = vshrl.u32 %v375, 16
        %v413 = vrot.slane %v411, 7
        %v414 = vshll.u32 %v375, 16
        %v416 = vor.u32 %v413, %v414
        %v417 = vrot.slane %v413, 4
        %v419 = vshrl.u32 %v376, 16
        %v421 = vrot.slane %v419, 7
        %v422 = vshll.u32 %v376, 16
        %v424 = vor.u32 %v421, %v422
        %v425 = vsel %vm409, %v417, %v424
        %v426 = vrot.slane %v421, 4
        %v428 = vshrl.u32 %v377, 16
        %v430 = vrot.slane %v428, 7
        %v431 = vshll.u32 %v377, 16
        %v433 = vor.u32 %v430, %v431
        %v434 = vrot.slane %v430, 4
        %v436 = vshrl.u32 %v378, 16
        %v438 = vrot.slane %v436, 7
        %v439 = vshll.u32 %v378, 16
        %v441 = vor.u32 %v438, %v439
        %v442 = vsel %vm409, %v434, %v441
        %v443 = vrot.slane %v438, 4
        %v445 = vshrl.u32 %v379, 16
        %v447 = vrot.slane %v445, 7
        %v448 = vshll.u32 %v379, 16
        %v450 = vor.u32 %v447, %v448
        %v451 = vrot.slane %v447, 4
        %v453 = vshrl.u32 %v380, 16
        %v455 = vrot.slane %v453, 7
        %v456 = vshll.u32 %v380, 16
        %v458 = vor.u32 %v455, %v456
        %v459 = vsel %vm409, %v451, %v458
        %v460 = vrot.slane %v455, 4
        %v462 = vshrl.u32 %v381, 16
        %v464 = vrot.slane %v462, 7
        %v465 = vshll.u32 %v381, 16
        %v467 = vor.u32 %v464, %v465
        %v468 = vrot.slane %v464, 4
        %v470 = vshrl.u32 %v382, 16
        %v472 = vrot.slane %v470, 7
        %v473 = vshll.u32 %v382, 16
        %v475 = vor.u32 %v472, %v473
        %v476 = vsel %vm409, %v468, %v475
        %v477 = vrot.slane %v472, 4
        %v479 = vshrl.u32 %v383, 16
        %v481 = vrot.slane %v479, 7
        %v482 = vshll.u32 %v383, 16
        %v484 = vor.u32 %v481, %v482
        %v485 = vrot.slane %v481, 4
        %v487 = vshrl.u32 %v384, 16
        %v489 = vrot.slane %v487, 7
        %v490 = vshll.u32 %v384, 16
        %v492 = vor.u32 %v489, %v490
        %v493 = vsel %vm409, %v485, %v492
        %v494 = vrot.slane %v489, 4
        %v496 = vshrl.u32 %v385, 16
        %v498 = vrot.slane %v496, 7
        %v499 = vshll.u32 %v385, 16
        %v501 = vor.u32 %v498, %v499
        %v502 = vrot.slane %v498, 4
        %v504 = vshrl.u32 %v386, 16
        %v506 = vrot.slane %v504, 7
        %v507 = vshll.u32 %v386, 16
        %v509 = vor.u32 %v506, %v507
        %v510 = vsel %vm409, %v502, %v509
        %v511 = vrot.slane %v506, 4
        %v513 = vshrl.u32 %v387, 16
        %v515 = vrot.slane %v513, 7
        %v516 = vshll.u32 %v387, 16
        %v518 = vor.u32 %v515, %v516
        %v519 = vrot.slane %v515, 4
        %v521 = vshrl.u32 %v388, 16
        %v523 = vrot.slane %v521, 7
        %v524 = vshll.u32 %v388, 16
        %v526 = vor.u32 %v523, %v524
        %v527 = vsel %vm409, %v519, %v526
        %v528 = vrot.slane %v523, 4
        %v530 = vshrl.u32 %v389, 16
        %v532 = vrot.slane %v530, 7
        %v533 = vshll.u32 %v389, 16
        %v535 = vor.u32 %v532, %v533
        %v536 = vrot.slane %v532, 4
        %v538 = vshrl.u32 %v390, 16
        %v540 = vrot.slane %v538, 7
        %v541 = vshll.u32 %v390, 16
        %v543 = vor.u32 %v540, %v541
        %v544 = vsel %vm409, %v536, %v543
        %v545 = vrot.slane %v540, 4
        %v547 = vshrl.u32 %v391, 16
        %v549 = vrot.slane %v547, 7
        %v550 = vshll.u32 %v391, 16
        %v552 = vor.u32 %v549, %v550
        %v553 = vrot.slane %v549, 4
        %v555 = vshrl.u32 %v392, 16
        %v557 = vrot.slane %v555, 7
        %v558 = vshll.u32 %v392, 16
        %v560 = vor.u32 %v557, %v558
        %v561 = vsel %vm409, %v553, %v560
        %v562 = vrot.slane %v557, 4
        %v564 = vshrl.u32 %v393, 16
        %v566 = vrot.slane %v564, 7
        %v567 = vshll.u32 %v393, 16
        %v569 = vor.u32 %v566, %v567
        %v570 = vrot.slane %v566, 4
        %v572 = vshrl.u32 %v394, 16
        %v574 = vrot.slane %v572, 7
        %v575 = vshll.u32 %v394, 16
        %v577 = vor.u32 %v574, %v575
        %v578 = vsel %vm409, %v570, %v577
        %v579 = vrot.slane %v574, 4
        %v581 = vshrl.u32 %v395, 16
        %v583 = vrot.slane %v581, 7
        %v584 = vshll.u32 %v395, 16
        %v586 = vor.u32 %v583, %v584
        %v587 = vrot.slane %v583, 4
        %v589 = vshrl.u32 %v396, 16
        %v591 = vrot.slane %v589, 7
        %v592 = vshll.u32 %v396, 16
        %v594 = vor.u32 %v591, %v592
        %v595 = vsel %vm409, %v587, %v594
        %v596 = vrot.slane %v591, 4
        %v598 = vshrl.u32 %v397, 16
        %v600 = vrot.slane %v598, 7
        %v601 = vshll.u32 %v397, 16
        %v603 = vor.u32 %v600, %v601
        %v604 = vrot.slane %v600, 4
        %v606 = vshrl.u32 %v398, 16
        %v608 = vrot.slane %v606, 7
        %v609 = vshll.u32 %v398, 16
        %v611 = vor.u32 %v608, %v609
        %v612 = vsel %vm409, %v604, %v611
        %v613 = vrot.slane %v608, 4
        %v615 = vshrl.u32 %v399, 16
        %v617 = vrot.slane %v615, 7
        %v618 = vshll.u32 %v399, 16
        %v620 = vor.u32 %v617, %v618
        %v621 = vrot.slane %v617, 4
        %v623 = vshrl.u32 %v400, 16
        %v625 = vrot.slane %v623, 7
        %v626 = vshll.u32 %v400, 16
        %v628 = vor.u32 %v625, %v626
        %v629 = vsel %vm409, %v621, %v628
        %v630 = vrot.slane %v625, 4
        %v632 = vshrl.u32 %v401, 16
        %v634 = vrot.slane %v632, 7
        %v635 = vshll.u32 %v401, 16
        %v637 = vor.u32 %v634, %v635
        %v638 = vrot.slane %v634, 4
        %v640 = vshrl.u32 %v402, 16
        %v642 = vrot.slane %v640, 7
        %v643 = vshll.u32 %v402, 16
        %v645 = vor.u32 %v642, %v643
        %v646 = vsel %vm409, %v638, %v645
        %v647 = vrot.slane %v642, 4
        %v649 = vshrl.u32 %v403, 16
        %v651 = vrot.slane %v649, 7
        %v652 = vshll.u32 %v403, 16
        %v654 = vor.u32 %v651, %v652
        %v655 = vrot.slane %v651, 4
        %v657 = vshrl.u32 %v404, 16
        %v659 = vrot.slane %v657, 7
        %v660 = vshll.u32 %v404, 16
        %v662 = vor.u32 %v659, %v660
        %v663 = vsel %vm409, %v655, %v662
        %v664 = vrot.slane %v659, 4
        %v666 = vshrl.u32 %v405, 16
        %v668 = vrot.slane %v666, 7
        %v669 = vshll.u32 %v405, 16
        %v671 = vor.u32 %v668, %v669
        %v672 = vrot.slane %v668, 4
        %v674 = vshrl.u32 %v406, 16
        %v676 = vrot.slane %v674, 7
        %v677 = vshll.u32 %v406, 16
        %v679 = vor.u32 %v676, %v677
        %v680 = vsel %vm409, %v672, %v679
        %v681 = vrot.slane %v676, 4
        %s730 = scalar_lea.vmem [#allocation2], 24
        %vm731 = vcmask 27648
        %vm732 = vsmask.f32 7938
        %vm733 = vmand %vm731, %vm732
        %v734 = vld [vmem:[%s730] sm:$0xf]
        %v735 = vsel %vm733, %v416, %v734
        %736 = vst [vmem:[%s730] sm:$0xf] %v735
        %737 = vst.msk [vmem:[%s730 + $0x4] sm:$0xf] %vm251, %v425
        %vm738 = vcmask 24576
        %vm739 = vmand %vm738, %vm407
        %v740 = vld [vmem:[%s730 + $0x8] sm:$0x1]
        %v741 = vsel %vm739, %v426, %v740
        %742 = vst [vmem:[%s730 + $0x8] sm:$0x1] %v741
        %v743 = vld [vmem:[%s730 + $0xc] sm:$0xf]
        %v744 = vsel %vm733, %v433, %v743
        %745 = vst [vmem:[%s730 + $0xc] sm:$0xf] %v744
        %746 = vst.msk [vmem:[%s730 + $0x10] sm:$0xf] %vm251, %v442
        %v747 = vld [vmem:[%s730 + $0x14] sm:$0x1]
        %v748 = vsel %vm739, %v443, %v747
        %749 = vst [vmem:[%s730 + $0x14] sm:$0x1] %v748
        %v750 = vld [vmem:[%s730 + $0x18] sm:$0xf]
        %v751 = vsel %vm733, %v450, %v750
        %752 = vst [vmem:[%s730 + $0x18] sm:$0xf] %v751
        %753 = vst.msk [vmem:[%s730 + $0x1c] sm:$0xf] %vm251, %v459
        %v754 = vld [vmem:[%s730 + $0x20] sm:$0x1]
        %v755 = vsel %vm739, %v460, %v754
        %756 = vst [vmem:[%s730 + $0x20] sm:$0x1] %v755
        %v757 = vld [vmem:[%s730 + $0x24] sm:$0xf]
        %v758 = vsel %vm733, %v467, %v757
        %759 = vst [vmem:[%s730 + $0x24] sm:$0xf] %v758
        %760 = vst.msk [vmem:[%s730 + $0x28] sm:$0xf] %vm251, %v476
        %v761 = vld [vmem:[%s730 + $0x2c] sm:$0x1]
        %v762 = vsel %vm739, %v477, %v761
        %763 = vst [vmem:[%s730 + $0x2c] sm:$0x1] %v762
        %v764 = vld [vmem:[%s730 + $0x30] sm:$0xf]
        %v765 = vsel %vm733, %v484, %v764
        %766 = vst [vmem:[%s730 + $0x30] sm:$0xf] %v765
        %767 = vst.msk [vmem:[%s730 + $0x34] sm:$0xf] %vm251, %v493
        %v768 = vld [vmem:[%s730 + $0x38] sm:$0x1]
        %v769 = vsel %vm739, %v494, %v768
        %770 = vst [vmem:[%s730 + $0x38] sm:$0x1] %v769
        %v771 = vld [vmem:[%s730 + $0x3c] sm:$0xf]
        %v772 = vsel %vm733, %v501, %v771
        %773 = vst [vmem:[%s730 + $0x3c] sm:$0xf] %v772
        %774 = vst.msk [vmem:[%s730 + $0x40] sm:$0xf] %vm251, %v510
        %v775 = vld [vmem:[%s730 + $0x44] sm:$0x1]
        %v776 = vsel %vm739, %v511, %v775
        %777 = vst [vmem:[%s730 + $0x44] sm:$0x1] %v776
        %v778 = vld [vmem:[%s730 + $0x48] sm:$0xf]
        %v779 = vsel %vm733, %v518, %v778
        %780 = vst [vmem:[%s730 + $0x48] sm:$0xf] %v779
        %781 = vst.msk [vmem:[%s730 + $0x4c] sm:$0xf] %vm251, %v527
        %v782 = vld [vmem:[%s730 + $0x50] sm:$0x1]
        %v783 = vsel %vm739, %v528, %v782
        %784 = vst [vmem:[%s730 + $0x50] sm:$0x1] %v783
        %v785 = vld [vmem:[%s730 + $0x54] sm:$0xf]
        %v786 = vsel %vm733, %v535, %v785
        %787 = vst [vmem:[%s730 + $0x54] sm:$0xf] %v786
        %788 = vst.msk [vmem:[%s730 + $0x58] sm:$0xf] %vm251, %v544
        %v789 = vld [vmem:[%s730 + $0x5c] sm:$0x1]
        %v790 = vsel %vm739, %v545, %v789
        %791 = vst [vmem:[%s730 + $0x5c] sm:$0x1] %v790
        %v792 = vld [vmem:[%s730 + $0x60] sm:$0xf]
        %v793 = vsel %vm733, %v552, %v792
        %794 = vst [vmem:[%s730 + $0x60] sm:$0xf] %v793
        %795 = vst.msk [vmem:[%s730 + $0x64] sm:$0xf] %vm251, %v561
        %v796 = vld [vmem:[%s730 + $0x68] sm:$0x1]
        %v797 = vsel %vm739, %v562, %v796
        %798 = vst [vmem:[%s730 + $0x68] sm:$0x1] %v797
        %v799 = vld [vmem:[%s730 + $0x6c] sm:$0xf]
        %v800 = vsel %vm733, %v569, %v799
        %801 = vst [vmem:[%s730 + $0x6c] sm:$0xf] %v800
        %802 = vst.msk [vmem:[%s730 + $0x70] sm:$0xf] %vm251, %v578
        %v803 = vld [vmem:[%s730 + $0x74] sm:$0x1]
        %v804 = vsel %vm739, %v579, %v803
        %805 = vst [vmem:[%s730 + $0x74] sm:$0x1] %v804
        %v806 = vld [vmem:[%s730 + $0x78] sm:$0xf]
        %v807 = vsel %vm733, %v586, %v806
        %808 = vst [vmem:[%s730 + $0x78] sm:$0xf] %v807
        %809 = vst.msk [vmem:[%s730 + $0x7c] sm:$0xf] %vm251, %v595
        %v810 = vld [vmem:[%s730 + $0x80] sm:$0x1]
        %v811 = vsel %vm739, %v596, %v810
        %812 = vst [vmem:[%s730 + $0x80] sm:$0x1] %v811
        %v813 = vld [vmem:[%s730 + $0x84] sm:$0xf]
        %v814 = vsel %vm733, %v603, %v813
        %815 = vst [vmem:[%s730 + $0x84] sm:$0xf] %v814
        %816 = vst.msk [vmem:[%s730 + $0x88] sm:$0xf] %vm251, %v612
        %v817 = vld [vmem:[%s730 + $0x8c] sm:$0x1]
        %v818 = vsel %vm739, %v613, %v817
        %819 = vst [vmem:[%s730 + $0x8c] sm:$0x1] %v818
        %v820 = vld [vmem:[%s730 + $0x90] sm:$0xf]
        %v821 = vsel %vm733, %v620, %v820
        %822 = vst [vmem:[%s730 + $0x90] sm:$0xf] %v821
        %823 = vst.msk [vmem:[%s730 + $0x94] sm:$0xf] %vm251, %v629
        %v824 = vld [vmem:[%s730 + $0x98] sm:$0x1]
        %v825 = vsel %vm739, %v630, %v824
        %826 = vst [vmem:[%s730 + $0x98] sm:$0x1] %v825
        %v827 = vld [vmem:[%s730 + $0x9c] sm:$0xf]
        %v828 = vsel %vm733, %v637, %v827
        %829 = vst [vmem:[%s730 + $0x9c] sm:$0xf] %v828
        %830 = vst.msk [vmem:[%s730 + $0xa0] sm:$0xf] %vm251, %v646
        %v831 = vld [vmem:[%s730 + $0xa4] sm:$0x1]
        %v832 = vsel %vm739, %v647, %v831
        %833 = vst [vmem:[%s730 + $0xa4] sm:$0x1] %v832
        %v834 = vld [vmem:[%s730 + $0xa8] sm:$0xf]
        %v835 = vsel %vm733, %v654, %v834
        %836 = vst [vmem:[%s730 + $0xa8] sm:$0xf] %v835
        %837 = vst.msk [vmem:[%s730 + $0xac] sm:$0xf] %vm251, %v663
        %v838 = vld [vmem:[%s730 + $0xb0] sm:$0x1]
        %v839 = vsel %vm739, %v664, %v838
        %840 = vst [vmem:[%s730 + $0xb0] sm:$0x1] %v839
        %v841 = vld [vmem:[%s730 + $0xb4] sm:$0xf]
        %v842 = vsel %vm733, %v671, %v841
        %843 = vst [vmem:[%s730 + $0xb4] sm:$0xf] %v842
        %844 = vst.msk [vmem:[%s730 + $0xb8] sm:$0xf] %vm251, %v680
        %v845 = vld [vmem:[%s730 + $0xbc] sm:$0x1]
        %v846 = vsel %vm739, %v681, %v845
        %847 = vst [vmem:[%s730 + $0xbc] sm:$0x1] %v846
      $region44: #{basic_block_forward.1} parent=39 // pred_fallthru
        _
      %s848 = smul.u32 %s246, 3
      %s849 = smul.addr %s848, 4
      %s850 = scalar_lea.vmem [#allocation2], %s849
      %v851 = vld [vmem:[%s850] sm:$0xf]
      %v852 = vld [vmem:[%s850 + $0x4] sm:$0xf]
      %v853 = vld [vmem:[%s850 + $0x8] sm:$0x1]
      %v854 = vld [vmem:[%s850 + $0xc] sm:$0xf]
      %v855 = vld [vmem:[%s850 + $0x10] sm:$0xf]
      %v856 = vld [vmem:[%s850 + $0x14] sm:$0x1]
      %v857 = vld [vmem:[%s850 + $0x18] sm:$0xf]
      %v858 = vld [vmem:[%s850 + $0x1c] sm:$0xf]
      %v859 = vld [vmem:[%s850 + $0x20] sm:$0x1]
      %v860 = vld [vmem:[%s850 + $0x24] sm:$0xf]
      %v861 = vld [vmem:[%s850 + $0x28] sm:$0xf]
      %v862 = vld [vmem:[%s850 + $0x2c] sm:$0x1]
      %v863 = vld [vmem:[%s850 + $0x30] sm:$0xf]
      %v864 = vld [vmem:[%s850 + $0x34] sm:$0xf]
      %v865 = vld [vmem:[%s850 + $0x38] sm:$0x1]
      %v866 = vld [vmem:[%s850 + $0x3c] sm:$0xf]
      %v867 = vld [vmem:[%s850 + $0x40] sm:$0xf]
      %v868 = vld [vmem:[%s850 + $0x44] sm:$0x1]
      %v869 = vld [vmem:[%s850 + $0x48] sm:$0xf]
      %v870 = vld [vmem:[%s850 + $0x4c] sm:$0xf]
      %v871 = vld [vmem:[%s850 + $0x50] sm:$0x1]
      %v872 = vld [vmem:[%s850 + $0x54] sm:$0xf]
      %v873 = vld [vmem:[%s850 + $0x58] sm:$0xf]
      %v874 = vld [vmem:[%s850 + $0x5c] sm:$0x1]
      %v875 = vld [vmem:[%s850 + $0x60] sm:$0xf]
      %v876 = vld [vmem:[%s850 + $0x64] sm:$0xf]
      %v877 = vld [vmem:[%s850 + $0x68] sm:$0x1]
      %v878 = vld [vmem:[%s850 + $0x6c] sm:$0xf]
      %v879 = vld [vmem:[%s850 + $0x70] sm:$0xf]
      %v880 = vld [vmem:[%s850 + $0x74] sm:$0x1]
      %v881 = vld [vmem:[%s850 + $0x78] sm:$0xf]
      %v882 = vld [vmem:[%s850 + $0x7c] sm:$0xf]
      %v883 = vld [vmem:[%s850 + $0x80] sm:$0x1]
      %v884 = vld [vmem:[%s850 + $0x84] sm:$0xf]
      %v885 = vld [vmem:[%s850 + $0x88] sm:$0xf]
      %v886 = vld [vmem:[%s850 + $0x8c] sm:$0x1]
      %v907 = vunpack.c.l.b16 %v851
      %v908 = vunpack.c.l.b16 %v852
      %v909 = vunpack.c.l.b16 %v854
      %v910 = vunpack.c.l.b16 %v855
      %v911 = vunpack.c.l.b16 %v857
      %v912 = vunpack.c.l.b16 %v858
      %v913 = vunpack.c.l.b16 %v860
      %v914 = vunpack.c.l.b16 %v861
      %v915 = vunpack.c.l.b16 %v863
      %v916 = vunpack.c.l.b16 %v864
      %v917 = vunpack.c.l.b16 %v866
      %v918 = vunpack.c.l.b16 %v867
      %v919 = vunpack.c.l.b16 %v869
      %v920 = vunpack.c.l.b16 %v870
      %v921 = vunpack.c.l.b16 %v872
      %v922 = vunpack.c.l.b16 %v873
      %v923 = vunpack.c.l.b16 %v875
      %v924 = vunpack.c.l.b16 %v876
      %v925 = vunpack.c.l.b16 %v878
      %v926 = vunpack.c.l.b16 %v879
      %v927 = vpack.c.b16 %v908, %v907
      %v928 = vpack.c.b16 %v910, %v909
      %v929 = vpack.c.b16 %v912, %v911
      %v930 = vpack.c.b16 %v914, %v913
      %v931 = vpack.c.b16 %v916, %v915
      %v932 = vpack.c.b16 %v918, %v917
      %v933 = vpack.c.b16 %v920, %v919
      %v934 = vpack.c.b16 %v922, %v921
      %v935 = vpack.c.b16 %v924, %v923
      %v936 = vpack.c.b16 %v926, %v925
      %v947 = vunpack.c.l.b16 %v853
      %v948 = vunpack.c.l.b16 %v856
      %v949 = vunpack.c.l.b16 %v859
      %v950 = vunpack.c.l.b16 %v862
      %v951 = vunpack.c.l.b16 %v865
      %v952 = vunpack.c.l.b16 %v868
      %v953 = vunpack.c.l.b16 %v871
      %v954 = vunpack.c.l.b16 %v874
      %v955 = vunpack.c.l.b16 %v877
      %v956 = vunpack.c.l.b16 %v880
      %v957 = vpack.c.b16 %v947, %v947
      %v958 = vpack.c.b16 %v948, %v948
      %v959 = vpack.c.b16 %v949, %v949
      %v960 = vpack.c.b16 %v950, %v950
      %v961 = vpack.c.b16 %v951, %v951
      %v962 = vpack.c.b16 %v952, %v952
      %v963 = vpack.c.b16 %v953, %v953
      %v964 = vpack.c.b16 %v954, %v954
      %v965 = vpack.c.b16 %v955, %v955
      %v966 = vpack.c.b16 %v956, %v956
      %vm967 = vsmask.f32 7424
      %v969 = vshrl.u32 %v927, 16
      %v971 = vshll.u32 %v927, 16
      %v973 = vrot.slane %v971, 1
      %v974 = vor.u32 %v969, %v973
      %v976 = vshll.u32 %v957, 16
      %v978 = vrot.slane %v976, 1
      %v979 = vsel %vm967, %v974, %v978
      %v981 = vshrl.u32 %v928, 16
      %v983 = vshll.u32 %v928, 16
      %v985 = vrot.slane %v983, 1
      %v986 = vor.u32 %v981, %v985
      %v988 = vshll.u32 %v958, 16
      %v990 = vrot.slane %v988, 1
      %v991 = vsel %vm967, %v986, %v990
      %v993 = vshrl.u32 %v929, 16
      %v995 = vshll.u32 %v929, 16
      %v997 = vrot.slane %v995, 1
      %v998 = vor.u32 %v993, %v997
      %v1000 = vshll.u32 %v959, 16
      %v1002 = vrot.slane %v1000, 1
      %v1003 = vsel %vm967, %v998, %v1002
      %v1005 = vshrl.u32 %v930, 16
      %v1007 = vshll.u32 %v930, 16
      %v1009 = vrot.slane %v1007, 1
      %v1010 = vor.u32 %v1005, %v1009
      %v1012 = vshll.u32 %v960, 16
      %v1014 = vrot.slane %v1012, 1
      %v1015 = vsel %vm967, %v1010, %v1014
      %v1017 = vshrl.u32 %v931, 16
      %v1019 = vshll.u32 %v931, 16
      %v1021 = vrot.slane %v1019, 1
      %v1022 = vor.u32 %v1017, %v1021
      %v1024 = vshll.u32 %v961, 16
      %v1026 = vrot.slane %v1024, 1
      %v1027 = vsel %vm967, %v1022, %v1026
      %v1029 = vshrl.u32 %v932, 16
      %v1031 = vshll.u32 %v932, 16
      %v1033 = vrot.slane %v1031, 1
      %v1034 = vor.u32 %v1029, %v1033
      %v1036 = vshll.u32 %v962, 16
      %v1038 = vrot.slane %v1036, 1
      %v1039 = vsel %vm967, %v1034, %v1038
      %v1041 = vshrl.u32 %v933, 16
      %v1043 = vshll.u32 %v933, 16
      %v1045 = vrot.slane %v1043, 1
      %v1046 = vor.u32 %v1041, %v1045
      %v1048 = vshll.u32 %v963, 16
      %v1050 = vrot.slane %v1048, 1
      %v1051 = vsel %vm967, %v1046, %v1050
      %v1053 = vshrl.u32 %v934, 16
      %v1055 = vshll.u32 %v934, 16
      %v1057 = vrot.slane %v1055, 1
      %v1058 = vor.u32 %v1053, %v1057
      %v1060 = vshll.u32 %v964, 16
      %v1062 = vrot.slane %v1060, 1
      %v1063 = vsel %vm967, %v1058, %v1062
      %v1065 = vshrl.u32 %v935, 16
      %v1067 = vshll.u32 %v935, 16
      %v1069 = vrot.slane %v1067, 1
      %v1070 = vor.u32 %v1065, %v1069
      %v1072 = vshll.u32 %v965, 16
      %v1074 = vrot.slane %v1072, 1
      %v1075 = vsel %vm967, %v1070, %v1074
      %v1077 = vshrl.u32 %v936, 16
      %v1079 = vshll.u32 %v936, 16
      %v1081 = vrot.slane %v1079, 1
      %v1082 = vor.u32 %v1077, %v1081
      %v1084 = vshll.u32 %v966, 16
      %v1086 = vrot.slane %v1084, 1
      %v1087 = vsel %vm967, %v1082, %v1086
      %1088 = vrot.lane.b32.xlu0 %v979, 4
      %v1089 = vpop.permute.xlu0 %1088
      %1090 = vrot.lane.b32.xlu0 %v991, 4
      %v1091 = vpop.permute.xlu0 %1090
      %1092 = vrot.lane.b32.xlu0 %v1003, 4
      %v1093 = vpop.permute.xlu0 %1092
      %1094 = vrot.lane.b32.xlu0 %v1015, 4
      %v1095 = vpop.permute.xlu0 %1094
      %1096 = vrot.lane.b32.xlu0 %v1027, 4
      %v1097 = vpop.permute.xlu0 %1096
      %1098 = vrot.lane.b32.xlu0 %v1039, 4
      %v1099 = vpop.permute.xlu0 %1098
      %1100 = vrot.lane.b32.xlu0 %v1051, 4
      %v1101 = vpop.permute.xlu0 %1100
      %1102 = vrot.lane.b32.xlu0 %v1063, 4
      %v1103 = vpop.permute.xlu0 %1102
      %1104 = vrot.lane.b32.xlu0 %v1075, 4
      %v1105 = vpop.permute.xlu0 %1104
      %1106 = vrot.lane.b32.xlu0 %v1087, 4
      %v1107 = vpop.permute.xlu0 %1106
      %vm1108 = vcmask 1046528
      %v1109 = vrot.slane %v927, 1
      %v1110 = vrot.slane %v957, 1
      %v1111 = vsel %vm1108, %v1109, %v1110
      %v1112 = vrot.slane %v928, 1
      %v1113 = vrot.slane %v958, 1
      %v1114 = vsel %vm1108, %v1112, %v1113
      %v1115 = vrot.slane %v929, 1
      %v1116 = vrot.slane %v959, 1
      %v1117 = vsel %vm1108, %v1115, %v1116
      %v1118 = vrot.slane %v930, 1
      %v1119 = vrot.slane %v960, 1
      %v1120 = vsel %vm1108, %v1118, %v1119
      %v1121 = vrot.slane %v931, 1
      %v1122 = vrot.slane %v961, 1
      %v1123 = vsel %vm1108, %v1121, %v1122
      %v1124 = vrot.slane %v932, 1
      %v1125 = vrot.slane %v962, 1
      %v1126 = vsel %vm1108, %v1124, %v1125
      %v1127 = vrot.slane %v933, 1
      %v1128 = vrot.slane %v963, 1
      %v1129 = vsel %vm1108, %v1127, %v1128
      %v1130 = vrot.slane %v934, 1
      %v1131 = vrot.slane %v964, 1
      %v1132 = vsel %vm1108, %v1130, %v1131
      %v1133 = vrot.slane %v935, 1
      %v1134 = vrot.slane %v965, 1
      %v1135 = vsel %vm1108, %v1133, %v1134
      %v1136 = vrot.slane %v936, 1
      %v1137 = vrot.slane %v966, 1
      %v1138 = vsel %vm1108, %v1136, %v1137
      %1139 = vrot.lane.b32.xlu0 %v1111, 8
      %v1140 = vpop.permute.xlu0 %1139
      %1141 = vrot.lane.b32.xlu0 %v1114, 8
      %v1142 = vpop.permute.xlu0 %1141
      %1143 = vrot.lane.b32.xlu0 %v1117, 8
      %v1144 = vpop.permute.xlu0 %1143
      %1145 = vrot.lane.b32.xlu0 %v1120, 8
      %v1146 = vpop.permute.xlu0 %1145
      %1147 = vrot.lane.b32.xlu0 %v1123, 8
      %v1148 = vpop.permute.xlu0 %1147
      %1149 = vrot.lane.b32.xlu0 %v1126, 8
      %v1150 = vpop.permute.xlu0 %1149
      %1151 = vrot.lane.b32.xlu0 %v1129, 8
      %v1152 = vpop.permute.xlu0 %1151
      %1153 = vrot.lane.b32.xlu0 %v1132, 8
      %v1154 = vpop.permute.xlu0 %1153
      %1155 = vrot.lane.b32.xlu0 %v1135, 8
      %v1156 = vpop.permute.xlu0 %1155
      %1157 = vrot.lane.b32.xlu0 %v1138, 8
      %v1158 = vpop.permute.xlu0 %1157
      %v1161 = vunpack.c.l.b16 %v881
      %v1162 = vunpack.c.l.b16 %v882
      %v1163 = vpack.c.b16 %v1162, %v1161
      %1164 = vrot.lane.b32.xlu0 %v928, 12
      %v1165 = vpop.permute.xlu0 %1164
      %1166 = vrot.lane.b32.xlu0 %v929, 12
      %v1167 = vpop.permute.xlu0 %1166
      %1168 = vrot.lane.b32.xlu0 %v930, 12
      %v1169 = vpop.permute.xlu0 %1168
      %1170 = vrot.lane.b32.xlu0 %v931, 12
      %v1171 = vpop.permute.xlu0 %1170
      %1172 = vrot.lane.b32.xlu0 %v932, 12
      %v1173 = vpop.permute.xlu0 %1172
      %1174 = vrot.lane.b32.xlu0 %v933, 12
      %v1175 = vpop.permute.xlu0 %1174
      %1176 = vrot.lane.b32.xlu0 %v934, 12
      %v1177 = vpop.permute.xlu0 %1176
      %1178 = vrot.lane.b32.xlu0 %v935, 12
      %v1179 = vpop.permute.xlu0 %1178
      %1180 = vrot.lane.b32.xlu0 %v936, 12
      %v1181 = vpop.permute.xlu0 %1180
      %1182 = vrot.lane.b32.xlu0 %v1163, 12
      %v1183 = vpop.permute.xlu0 %1182
      %v1185 = vunpack.c.l.b16 %v883
      %v1186 = vpack.c.b16 %v1185, %v1185
      %v1188 = vshrl.u32 %v1163, 16
      %v1190 = vshll.u32 %v1163, 16
      %v1192 = vrot.slane %v1190, 1
      %v1193 = vor.u32 %v1188, %v1192
      %v1195 = vshll.u32 %v1186, 16
      %v1197 = vrot.slane %v1195, 1
      %v1198 = vsel %vm967, %v1193, %v1197
      %1199 = vrot.lane.b32.xlu0 %v991, 16
      %v1200 = vpop.permute.xlu0 %1199
      %1201 = vrot.lane.b32.xlu0 %v1003, 16
      %v1202 = vpop.permute.xlu0 %1201
      %1203 = vrot.lane.b32.xlu0 %v1015, 16
      %v1204 = vpop.permute.xlu0 %1203
      %1205 = vrot.lane.b32.xlu0 %v1027, 16
      %v1206 = vpop.permute.xlu0 %1205
      %1207 = vrot.lane.b32.xlu0 %v1039, 16
      %v1208 = vpop.permute.xlu0 %1207
      %1209 = vrot.lane.b32.xlu0 %v1051, 16
      %v1210 = vpop.permute.xlu0 %1209
      %1211 = vrot.lane.b32.xlu0 %v1063, 16
      %v1212 = vpop.permute.xlu0 %1211
      %1213 = vrot.lane.b32.xlu0 %v1075, 16
      %v1214 = vpop.permute.xlu0 %1213
      %1215 = vrot.lane.b32.xlu0 %v1087, 16
      %v1216 = vpop.permute.xlu0 %1215
      %1217 = vrot.lane.b32.xlu0 %v1198, 16
      %v1218 = vpop.permute.xlu0 %1217
      %v1219 = vrot.slane %v1163, 1
      %v1220 = vrot.slane %v1186, 1
      %v1221 = vsel %vm1108, %v1219, %v1220
      %1222 = vrot.lane.b32.xlu0 %v1114, 20
      %v1223 = vpop.permute.xlu0 %1222
      %1224 = vrot.lane.b32.xlu0 %v1117, 20
      %v1225 = vpop.permute.xlu0 %1224
      %1226 = vrot.lane.b32.xlu0 %v1120, 20
      %v1227 = vpop.permute.xlu0 %1226
      %1228 = vrot.lane.b32.xlu0 %v1123, 20
      %v1229 = vpop.permute.xlu0 %1228
      %1230 = vrot.lane.b32.xlu0 %v1126, 20
      %v1231 = vpop.permute.xlu0 %1230
      %1232 = vrot.lane.b32.xlu0 %v1129, 20
      %v1233 = vpop.permute.xlu0 %1232
      %1234 = vrot.lane.b32.xlu0 %v1132, 20
      %v1235 = vpop.permute.xlu0 %1234
      %1236 = vrot.lane.b32.xlu0 %v1135, 20
      %v1237 = vpop.permute.xlu0 %1236
      %1238 = vrot.lane.b32.xlu0 %v1138, 20
      %v1239 = vpop.permute.xlu0 %1238
      %1240 = vrot.lane.b32.xlu0 %v1221, 20
      %v1241 = vpop.permute.xlu0 %1240
      %v1244 = vunpack.c.l.b16 %v884
      %v1245 = vunpack.c.l.b16 %v885
      %v1246 = vpack.c.b16 %v1245, %v1244
      %1247 = vrot.lane.b32.xlu0 %v929, 24
      %v1248 = vpop.permute.xlu0 %1247
      %1249 = vrot.lane.b32.xlu0 %v930, 24
      %v1250 = vpop.permute.xlu0 %1249
      %1251 = vrot.lane.b32.xlu0 %v931, 24
      %v1252 = vpop.permute.xlu0 %1251
      %1253 = vrot.lane.b32.xlu0 %v932, 24
      %v1254 = vpop.permute.xlu0 %1253
      %1255 = vrot.lane.b32.xlu0 %v933, 24
      %v1256 = vpop.permute.xlu0 %1255
      %1257 = vrot.lane.b32.xlu0 %v934, 24
      %v1258 = vpop.permute.xlu0 %1257
      %1259 = vrot.lane.b32.xlu0 %v935, 24
      %v1260 = vpop.permute.xlu0 %1259
      %1261 = vrot.lane.b32.xlu0 %v936, 24
      %v1262 = vpop.permute.xlu0 %1261
      %1263 = vrot.lane.b32.xlu0 %v1163, 24
      %v1264 = vpop.permute.xlu0 %1263
      %1265 = vrot.lane.b32.xlu0 %v1246, 24
      %v1266 = vpop.permute.xlu0 %1265
      %v1268 = vunpack.c.l.b16 %v886
      %v1269 = vpack.c.b16 %v1268, %v1268
      %v1271 = vshrl.u32 %v1246, 16
      %v1273 = vshll.u32 %v1246, 16
      %v1275 = vrot.slane %v1273, 1
      %v1276 = vor.u32 %v1271, %v1275
      %v1278 = vshll.u32 %v1269, 16
      %v1280 = vrot.slane %v1278, 1
      %v1281 = vsel %vm967, %v1276, %v1280
      %1282 = vrot.lane.b32.xlu0 %v1003, 28
      %v1283 = vpop.permute.xlu0 %1282
      %1284 = vrot.lane.b32.xlu0 %v1015, 28
      %v1285 = vpop.permute.xlu0 %1284
      %1286 = vrot.lane.b32.xlu0 %v1027, 28
      %v1287 = vpop.permute.xlu0 %1286
      %1288 = vrot.lane.b32.xlu0 %v1039, 28
      %v1289 = vpop.permute.xlu0 %1288
      %1290 = vrot.lane.b32.xlu0 %v1051, 28
      %v1291 = vpop.permute.xlu0 %1290
      %1292 = vrot.lane.b32.xlu0 %v1063, 28
      %v1293 = vpop.permute.xlu0 %1292
      %1294 = vrot.lane.b32.xlu0 %v1075, 28
      %v1295 = vpop.permute.xlu0 %1294
      %1296 = vrot.lane.b32.xlu0 %v1087, 28
      %v1297 = vpop.permute.xlu0 %1296
      %1298 = vrot.lane.b32.xlu0 %v1198, 28
      %v1299 = vpop.permute.xlu0 %1298
      %1300 = vrot.lane.b32.xlu0 %v1281, 28
      %v1301 = vpop.permute.xlu0 %1300
      %v1302 = vrot.slane %v1246, 1
      %v1303 = vrot.slane %v1269, 1
      %v1304 = vsel %vm1108, %v1302, %v1303
      %1305 = vrot.lane.b32.xlu0 %v1117, 32
      %v1306 = vpop.permute.xlu0 %1305
      %1307 = vrot.lane.b32.xlu0 %v1120, 32
      %v1308 = vpop.permute.xlu0 %1307
      %1309 = vrot.lane.b32.xlu0 %v1123, 32
      %v1310 = vpop.permute.xlu0 %1309
      %1311 = vrot.lane.b32.xlu0 %v1126, 32
      %v1312 = vpop.permute.xlu0 %1311
      %1313 = vrot.lane.b32.xlu0 %v1129, 32
      %v1314 = vpop.permute.xlu0 %1313
      %1315 = vrot.lane.b32.xlu0 %v1132, 32
      %v1316 = vpop.permute.xlu0 %1315
      %1317 = vrot.lane.b32.xlu0 %v1135, 32
      %v1318 = vpop.permute.xlu0 %1317
      %1319 = vrot.lane.b32.xlu0 %v1138, 32
      %v1320 = vpop.permute.xlu0 %1319
      %1321 = vrot.lane.b32.xlu0 %v1221, 32
      %v1322 = vpop.permute.xlu0 %1321
      %1323 = vrot.lane.b32.xlu0 %v1304, 32
      %v1324 = vpop.permute.xlu0 %1323
      %vm1325 = vcmask 31744
      %v1327 = vsel %vm1325, %v927, %v1089
      %v1329 = vsel %vm1325, %v928, %v1091
      %v1331 = vsel %vm1325, %v929, %v1093
      %v1333 = vsel %vm1325, %v930, %v1095
      %v1335 = vsel %vm1325, %v931, %v1097
      %v1337 = vsel %vm1325, %v932, %v1099
      %v1339 = vsel %vm1325, %v933, %v1101
      %v1341 = vsel %vm1325, %v934, %v1103
      %v1343 = vsel %vm1325, %v935, %v1105
      %v1345 = vsel %vm1325, %v936, %v1107
      %vm1346 = vcmask 64512
      %v1348 = vsel %vm1346, %v1327, %v1140
      %v1350 = vsel %vm1346, %v1329, %v1142
      %v1352 = vsel %vm1346, %v1331, %v1144
      %v1354 = vsel %vm1346, %v1333, %v1146
      %v1356 = vsel %vm1346, %v1335, %v1148
      %v1358 = vsel %vm1346, %v1337, %v1150
      %v1360 = vsel %vm1346, %v1339, %v1152
      %v1362 = vsel %vm1346, %v1341, %v1154
      %v1364 = vsel %vm1346, %v1343, %v1156
      %v1366 = vsel %vm1346, %v1345, %v1158
      %vm1367 = vcmask 97280
      %v1369 = vsel %vm1367, %v1348, %v1165
      %v1371 = vsel %vm1367, %v1350, %v1167
      %v1373 = vsel %vm1367, %v1352, %v1169
      %v1375 = vsel %vm1367, %v1354, %v1171
      %v1377 = vsel %vm1367, %v1356, %v1173
      %v1379 = vsel %vm1367, %v1358, %v1175
      %v1381 = vsel %vm1367, %v1360, %v1177
      %v1383 = vsel %vm1367, %v1362, %v1179
      %v1385 = vsel %vm1367, %v1364, %v1181
      %v1387 = vsel %vm1367, %v1366, %v1183
      %vm1388 = vcmask 130048
      %v1390 = vsel %vm1388, %v1369, %v1200
      %v1392 = vsel %vm1388, %v1371, %v1202
      %v1394 = vsel %vm1388, %v1373, %v1204
      %v1396 = vsel %vm1388, %v1375, %v1206
      %v1398 = vsel %vm1388, %v1377, %v1208
      %v1400 = vsel %vm1388, %v1379, %v1210
      %v1402 = vsel %vm1388, %v1381, %v1212
      %v1404 = vsel %vm1388, %v1383, %v1214
      %v1406 = vsel %vm1388, %v1385, %v1216
      %v1408 = vsel %vm1388, %v1387, %v1218
      %vm1409 = vcmask 162816
      %v1411 = vsel %vm1409, %v1390, %v1223
      %v1413 = vsel %vm1409, %v1392, %v1225
      %v1415 = vsel %vm1409, %v1394, %v1227
      %v1417 = vsel %vm1409, %v1396, %v1229
      %v1419 = vsel %vm1409, %v1398, %v1231
      %v1421 = vsel %vm1409, %v1400, %v1233
      %v1423 = vsel %vm1409, %v1402, %v1235
      %v1425 = vsel %vm1409, %v1404, %v1237
      %v1427 = vsel %vm1409, %v1406, %v1239
      %v1429 = vsel %vm1409, %v1408, %v1241
      %vm1430 = vcmask 195584
      %v1432 = vsel %vm1430, %v1411, %v1248
      %v1434 = vsel %vm1430, %v1413, %v1250
      %v1436 = vsel %vm1430, %v1415, %v1252
      %v1438 = vsel %vm1430, %v1417, %v1254
      %v1440 = vsel %vm1430, %v1419, %v1256
      %v1442 = vsel %vm1430, %v1421, %v1258
      %v1444 = vsel %vm1430, %v1423, %v1260
      %v1446 = vsel %vm1430, %v1425, %v1262
      %v1448 = vsel %vm1430, %v1427, %v1264
      %v1450 = vsel %vm1430, %v1429, %v1266
      %vm1451 = vcmask 228352
      %v1453 = vsel %vm1451, %v1432, %v1283
      %v1455 = vsel %vm1451, %v1434, %v1285
      %v1457 = vsel %vm1451, %v1436, %v1287
      %v1459 = vsel %vm1451, %v1438, %v1289
      %v1461 = vsel %vm1451, %v1440, %v1291
      %v1463 = vsel %vm1451, %v1442, %v1293
      %v1465 = vsel %vm1451, %v1444, %v1295
      %v1467 = vsel %vm1451, %v1446, %v1297
      %v1469 = vsel %vm1451, %v1448, %v1299
      %v1471 = vsel %vm1451, %v1450, %v1301
      %vm1472 = vcmask 261120
      %v1474 = vsel %vm1472, %v1453, %v1306
      %v1476 = vsel %vm1472, %v1455, %v1308
      %v1478 = vsel %vm1472, %v1457, %v1310
      %v1480 = vsel %vm1472, %v1459, %v1312
      %v1482 = vsel %vm1472, %v1461, %v1314
      %v1484 = vsel %vm1472, %v1463, %v1316
      %v1486 = vsel %vm1472, %v1465, %v1318
      %v1488 = vsel %vm1472, %v1467, %v1320
      %v1490 = vsel %vm1472, %v1469, %v1322
      %v1492 = vsel %vm1472, %v1471, %v1324
      %v1493 = vld [vmem:[%s1] sm:$0xf]
      %v1494 = vld [vmem:[%s1 + $0x4] sm:$0xf]
      %v1495 = vld [vmem:[%s1 + $0x8] sm:$0xf]
      %v1496 = vld [vmem:[%s1 + $0xc] sm:$0xf]
      %v1497 = vld [vmem:[%s1 + $0x10] sm:$0x3]
      %v1498 = vld [vmem:[%s2] sm:$0x1]
      %v1500 = vperm.slane %v1498, 0
      %v1507 = vunpack.c.l.b16 %v1493
      %v1508 = vunpack.c.l.b16 %v1494
      %v1509 = vunpack.c.l.b16 %v1495
      %v1510 = vunpack.c.l.b16 %v1496
      %v1511 = vunpack.c.l.b16 %v1497
      %v1512 = vpack.c.b16 %v1508, %v1507
      %v1513 = vpack.c.b16 %v1510, %v1509
      %v1514 = vpack.c.b16 %v1511, %v1511
      %vm1517 = vcmask 293888
      %v1518 = vsel %vm1517, %v1474, 0
      %v1520 = vsel %vm1517, %v1476, 0
      %v1522 = vsel %vm1517, %v1478, 0
      %v1524 = vsel %vm1517, %v1480, 0
      %v1526 = vsel %vm1517, %v1482, 0
      %v1528 = vsel %vm1517, %v1484, 0
      %v1530 = vsel %vm1517, %v1486, 0
      %v1532 = vsel %vm1517, %v1488, 0
      %v1534 = vsel %vm1517, %v1490, 0
      %v1536 = vsel %vm1517, %v1492, 0
      %vm1538 = vcmask 1041408
      %v1540 = vsel %vm1538, %v1514, 0
      %1542 = vmatpush.bf16.msra.mxu0 0
      %1543 = vmatpush.bf16.msra.mxu0 0
      %1544 = vmatpush.bf16.msra.mxu0 0
      %1545 = vmatpush.bf16.msra.mxu0 0
      %1546 = vmatpush.bf16.msra.mxu0 0
      %1547 = vmatpush.bf16.msra.mxu0 %v1540
      %1548 = vmatpush.bf16.msra.mxu0 %v1513
      %1549 = vmatpush.bf16.msra.mxu0 %v1512
      %1550 = vmatmul.bf16.gmra.mxu0 %v1518
      %v1551 = vpop.f32.mrf.mxu0
      %v1552 = vadd.f32 %v1500, %v1551
      %v1553 = vpop.f32.mrf.mxu0
      %v1554 = vadd.f32 %v1500, %v1553
      %1555 = vmatmul.bf16.gmra.mxu0 %v1520
      %v1556 = vpop.f32.mrf.mxu0
      %v1557 = vadd.f32 %v1500, %v1556
      %v1558 = vpop.f32.mrf.mxu0
      %v1559 = vadd.f32 %v1500, %v1558
      %1560 = vmatmul.bf16.gmra.mxu0 %v1522
      %v1561 = vpop.f32.mrf.mxu0
      %v1562 = vadd.f32 %v1500, %v1561
      %v1563 = vpop.f32.mrf.mxu0
      %v1564 = vadd.f32 %v1500, %v1563
      %1565 = vmatmul.bf16.gmra.mxu0 %v1524
      %v1566 = vpop.f32.mrf.mxu0
      %v1567 = vadd.f32 %v1500, %v1566
      %v1568 = vpop.f32.mrf.mxu0
      %v1569 = vadd.f32 %v1500, %v1568
      %1570 = vmatmul.bf16.gmra.mxu0 %v1526
      %v1571 = vpop.f32.mrf.mxu0
      %v1572 = vadd.f32 %v1500, %v1571
      %v1573 = vpop.f32.mrf.mxu0
      %v1574 = vadd.f32 %v1500, %v1573
      %1575 = vmatmul.bf16.gmra.mxu0 %v1528
      %v1576 = vpop.f32.mrf.mxu0
      %v1577 = vadd.f32 %v1500, %v1576
      %v1578 = vpop.f32.mrf.mxu0
      %v1579 = vadd.f32 %v1500, %v1578
      %1580 = vmatmul.bf16.gmra.mxu0 %v1530
      %v1581 = vpop.f32.mrf.mxu0
      %v1582 = vadd.f32 %v1500, %v1581
      %v1583 = vpop.f32.mrf.mxu0
      %v1584 = vadd.f32 %v1500, %v1583
      %1585 = vmatmul.bf16.gmra.mxu0 %v1532
      %v1586 = vpop.f32.mrf.mxu0
      %v1587 = vadd.f32 %v1500, %v1586
      %v1588 = vpop.f32.mrf.mxu0
      %v1589 = vadd.f32 %v1500, %v1588
      %1590 = vmatmul.bf16.gmra.mxu0 %v1534
      %v1591 = vpop.f32.mrf.mxu0
      %v1592 = vadd.f32 %v1500, %v1591
      %v1593 = vpop.f32.mrf.mxu0
      %v1594 = vadd.f32 %v1500, %v1593
      %1595 = vmatmul.bf16.gmra.mxu0 %v1536
      %v1596 = vpop.f32.mrf.mxu0
      %v1597 = vadd.f32 %v1500, %v1596
      %v1598 = vpop.f32.mrf.mxu0
      %v1599 = vadd.f32 %v1500, %v1598
      %1600 = vdwg.mxu0
      %v1601 = vmax.f32 %v1552, 0.0
      %v1602 = vmax.f32 %v1554, 0.0
      %v1603 = vmax.f32 %v1557, 0.0
      %v1604 = vmax.f32 %v1559, 0.0
      %v1605 = vmax.f32 %v1562, 0.0
      %v1606 = vmax.f32 %v1564, 0.0
      %v1607 = vmax.f32 %v1567, 0.0
      %v1608 = vmax.f32 %v1569, 0.0
      %v1609 = vmax.f32 %v1572, 0.0
      %v1610 = vmax.f32 %v1574, 0.0
      %v1611 = vmax.f32 %v1577, 0.0
      %v1612 = vmax.f32 %v1579, 0.0
      %v1613 = vmax.f32 %v1582, 0.0
      %v1614 = vmax.f32 %v1584, 0.0
      %v1615 = vmax.f32 %v1587, 0.0
      %v1616 = vmax.f32 %v1589, 0.0
      %v1617 = vmax.f32 %v1592, 0.0
      %v1618 = vmax.f32 %v1594, 0.0
      %v1619 = vmax.f32 %v1597, 0.0
      %v1620 = vmax.f32 %v1599, 0.0
      %v1621 = vpack.c.bf16 %v1601, %v1601
      %v1622 = vpack.c.bf16 %v1602, %v1602
      %v1623 = vpack.c.bf16 %v1603, %v1603
      %v1624 = vpack.c.bf16 %v1604, %v1604
      %v1625 = vpack.c.bf16 %v1605, %v1605
      %v1626 = vpack.c.bf16 %v1606, %v1606
      %v1627 = vpack.c.bf16 %v1607, %v1607
      %v1628 = vpack.c.bf16 %v1608, %v1608
      %v1629 = vpack.c.bf16 %v1609, %v1609
      %v1630 = vpack.c.bf16 %v1610, %v1610
      %v1631 = vpack.c.bf16 %v1611, %v1611
      %v1632 = vpack.c.bf16 %v1612, %v1612
      %v1633 = vpack.c.bf16 %v1613, %v1613
      %v1634 = vpack.c.bf16 %v1614, %v1614
      %v1635 = vpack.c.bf16 %v1615, %v1615
      %v1636 = vpack.c.bf16 %v1616, %v1616
      %v1637 = vpack.c.bf16 %v1617, %v1617
      %v1638 = vpack.c.bf16 %v1618, %v1618
      %v1639 = vpack.c.bf16 %v1619, %v1619
      %v1640 = vpack.c.bf16 %v1620, %v1620
      %vm1641 = vsmask.f32 256
      %vm1642 = vsmask.f32 4368
      %vm1643 = vmor %vm1641, %vm1642
      %v1645 = vshrl.u32 %v1621, 16
      %v1647 = vrot.slane %v1645, 7
      %v1648 = vshll.u32 %v1621, 16
      %v1650 = vor.u32 %v1647, %v1648
      %v1651 = vrot.slane %v1647, 4
      %v1653 = vshrl.u32 %v1622, 16
      %v1655 = vrot.slane %v1653, 7
      %v1656 = vshll.u32 %v1622, 16
      %v1658 = vor.u32 %v1655, %v1656
      %v1659 = vsel %vm1643, %v1651, %v1658
      %v1660 = vrot.slane %v1655, 4
      %v1662 = vshrl.u32 %v1623, 16
      %v1664 = vrot.slane %v1662, 7
      %v1665 = vshll.u32 %v1623, 16
      %v1667 = vor.u32 %v1664, %v1665
      %v1668 = vrot.slane %v1664, 4
      %v1670 = vshrl.u32 %v1624, 16
      %v1672 = vrot.slane %v1670, 7
      %v1673 = vshll.u32 %v1624, 16
      %v1675 = vor.u32 %v1672, %v1673
      %v1676 = vsel %vm1643, %v1668, %v1675
      %v1677 = vrot.slane %v1672, 4
      %v1679 = vshrl.u32 %v1625, 16
      %v1681 = vrot.slane %v1679, 7
      %v1682 = vshll.u32 %v1625, 16
      %v1684 = vor.u32 %v1681, %v1682
      %v1685 = vrot.slane %v1681, 4
      %v1687 = vshrl.u32 %v1626, 16
      %v1689 = vrot.slane %v1687, 7
      %v1690 = vshll.u32 %v1626, 16
      %v1692 = vor.u32 %v1689, %v1690
      %v1693 = vsel %vm1643, %v1685, %v1692
      %v1694 = vrot.slane %v1689, 4
      %v1696 = vshrl.u32 %v1627, 16
      %v1698 = vrot.slane %v1696, 7
      %v1699 = vshll.u32 %v1627, 16
      %v1701 = vor.u32 %v1698, %v1699
      %v1702 = vrot.slane %v1698, 4
      %v1704 = vshrl.u32 %v1628, 16
      %v1706 = vrot.slane %v1704, 7
      %v1707 = vshll.u32 %v1628, 16
      %v1709 = vor.u32 %v1706, %v1707
      %v1710 = vsel %vm1643, %v1702, %v1709
      %v1711 = vrot.slane %v1706, 4
      %v1713 = vshrl.u32 %v1629, 16
      %v1715 = vrot.slane %v1713, 7
      %v1716 = vshll.u32 %v1629, 16
      %v1718 = vor.u32 %v1715, %v1716
      %v1719 = vrot.slane %v1715, 4
      %v1721 = vshrl.u32 %v1630, 16
      %v1723 = vrot.slane %v1721, 7
      %v1724 = vshll.u32 %v1630, 16
      %v1726 = vor.u32 %v1723, %v1724
      %v1727 = vsel %vm1643, %v1719, %v1726
      %v1728 = vrot.slane %v1723, 4
      %v1730 = vshrl.u32 %v1631, 16
      %v1732 = vrot.slane %v1730, 7
      %v1733 = vshll.u32 %v1631, 16
      %v1735 = vor.u32 %v1732, %v1733
      %v1736 = vrot.slane %v1732, 4
      %v1738 = vshrl.u32 %v1632, 16
      %v1740 = vrot.slane %v1738, 7
      %v1741 = vshll.u32 %v1632, 16
      %v1743 = vor.u32 %v1740, %v1741
      %v1744 = vsel %vm1643, %v1736, %v1743
      %v1745 = vrot.slane %v1740, 4
      %v1747 = vshrl.u32 %v1633, 16
      %v1749 = vrot.slane %v1747, 7
      %v1750 = vshll.u32 %v1633, 16
      %v1752 = vor.u32 %v1749, %v1750
      %v1753 = vrot.slane %v1749, 4
      %v1755 = vshrl.u32 %v1634, 16
      %v1757 = vrot.slane %v1755, 7
      %v1758 = vshll.u32 %v1634, 16
      %v1760 = vor.u32 %v1757, %v1758
      %v1761 = vsel %vm1643, %v1753, %v1760
      %v1762 = vrot.slane %v1757, 4
      %v1764 = vshrl.u32 %v1635, 16
      %v1766 = vrot.slane %v1764, 7
      %v1767 = vshll.u32 %v1635, 16
      %v1769 = vor.u32 %v1766, %v1767
      %v1770 = vrot.slane %v1766, 4
      %v1772 = vshrl.u32 %v1636, 16
      %v1774 = vrot.slane %v1772, 7
      %v1775 = vshll.u32 %v1636, 16
      %v1777 = vor.u32 %v1774, %v1775
      %v1778 = vsel %vm1643, %v1770, %v1777
      %v1779 = vrot.slane %v1774, 4
      %v1781 = vshrl.u32 %v1637, 16
      %v1783 = vrot.slane %v1781, 7
      %v1784 = vshll.u32 %v1637, 16
      %v1786 = vor.u32 %v1783, %v1784
      %v1787 = vrot.slane %v1783, 4
      %v1789 = vshrl.u32 %v1638, 16
      %v1791 = vrot.slane %v1789, 7
      %v1792 = vshll.u32 %v1638, 16
      %v1794 = vor.u32 %v1791, %v1792
      %v1795 = vsel %vm1643, %v1787, %v1794
      %v1796 = vrot.slane %v1791, 4
      %v1798 = vshrl.u32 %v1639, 16
      %v1800 = vrot.slane %v1798, 7
      %v1801 = vshll.u32 %v1639, 16
      %v1803 = vor.u32 %v1800, %v1801
      %v1804 = vrot.slane %v1800, 4
      %v1806 = vshrl.u32 %v1640, 16
      %v1808 = vrot.slane %v1806, 7
      %v1809 = vshll.u32 %v1640, 16
      %v1811 = vor.u32 %v1808, %v1809
      %v1812 = vsel %vm1643, %v1804, %v1811
      %v1813 = vrot.slane %v1808, 4
      %vm1844 = vcmask 27648
      %vm1845 = vsmask.f32 7938
      %vm1846 = vmand %vm1844, %vm1845
      %v1847 = vld [vmem:[#allocation3] sm:$0xf]
      %v1848 = vsel %vm1846, %v1650, %v1847
      %1849 = vst [vmem:[#allocation3] sm:$0xf] %v1848
      %vm1850 = vcmask 27648
      %1851 = vst.msk [vmem:[#allocation3 + $0x4] sm:$0xf] %vm1850, %v1659
      %vm1852 = vcmask 24576
      %vm1853 = vmand %vm1852, %vm1641
      %v1854 = vld [vmem:[#allocation3 + $0x8] sm:$0x1]
      %v1855 = vsel %vm1853, %v1660, %v1854
      %1856 = vst [vmem:[#allocation3 + $0x8] sm:$0x1] %v1855
      %v1857 = vld [vmem:[#allocation3 + $0xc] sm:$0xf]
      %v1858 = vsel %vm1846, %v1667, %v1857
      %1859 = vst [vmem:[#allocation3 + $0xc] sm:$0xf] %v1858
      %1860 = vst.msk [vmem:[#allocation3 + $0x10] sm:$0xf] %vm1850, %v1676
      %v1861 = vld [vmem:[#allocation3 + $0x14] sm:$0x1]
      %v1862 = vsel %vm1853, %v1677, %v1861
      %1863 = vst [vmem:[#allocation3 + $0x14] sm:$0x1] %v1862
      %v1864 = vld [vmem:[#allocation3 + $0x18] sm:$0xf]
      %v1865 = vsel %vm1846, %v1684, %v1864
      %1866 = vst [vmem:[#allocation3 + $0x18] sm:$0xf] %v1865
      %1867 = vst.msk [vmem:[#allocation3 + $0x1c] sm:$0xf] %vm1850, %v1693
      %v1868 = vld [vmem:[#allocation3 + $0x20] sm:$0x1]
      %v1869 = vsel %vm1853, %v1694, %v1868
      %1870 = vst [vmem:[#allocation3 + $0x20] sm:$0x1] %v1869
      %v1871 = vld [vmem:[#allocation3 + $0x24] sm:$0xf]
      %v1872 = vsel %vm1846, %v1701, %v1871
      %1873 = vst [vmem:[#allocation3 + $0x24] sm:$0xf] %v1872
      %1874 = vst.msk [vmem:[#allocation3 + $0x28] sm:$0xf] %vm1850, %v1710
      %v1875 = vld [vmem:[#allocation3 + $0x2c] sm:$0x1]
      %v1876 = vsel %vm1853, %v1711, %v1875
      %1877 = vst [vmem:[#allocation3 + $0x2c] sm:$0x1] %v1876
      %v1878 = vld [vmem:[#allocation3 + $0x30] sm:$0xf]
      %v1879 = vsel %vm1846, %v1718, %v1878
      %1880 = vst [vmem:[#allocation3 + $0x30] sm:$0xf] %v1879
      %1881 = vst.msk [vmem:[#allocation3 + $0x34] sm:$0xf] %vm1850, %v1727
      %v1882 = vld [vmem:[#allocation3 + $0x38] sm:$0x1]
      %v1883 = vsel %vm1853, %v1728, %v1882
      %1884 = vst [vmem:[#allocation3 + $0x38] sm:$0x1] %v1883
      %v1885 = vld [vmem:[#allocation3 + $0x3c] sm:$0xf]
      %v1886 = vsel %vm1846, %v1735, %v1885
      %1887 = vst [vmem:[#allocation3 + $0x3c] sm:$0xf] %v1886
      %1888 = vst.msk [vmem:[#allocation3 + $0x40] sm:$0xf] %vm1850, %v1744
      %v1889 = vld [vmem:[#allocation3 + $0x44] sm:$0x1]
      %v1890 = vsel %vm1853, %v1745, %v1889
      %1891 = vst [vmem:[#allocation3 + $0x44] sm:$0x1] %v1890
      %v1892 = vld [vmem:[#allocation3 + $0x48] sm:$0xf]
      %v1893 = vsel %vm1846, %v1752, %v1892
      %1894 = vst [vmem:[#allocation3 + $0x48] sm:$0xf] %v1893
      %1895 = vst.msk [vmem:[#allocation3 + $0x4c] sm:$0xf] %vm1850, %v1761
      %v1896 = vld [vmem:[#allocation3 + $0x50] sm:$0x1]
      %v1897 = vsel %vm1853, %v1762, %v1896
      %1898 = vst [vmem:[#allocation3 + $0x50] sm:$0x1] %v1897
      %v1899 = vld [vmem:[#allocation3 + $0x54] sm:$0xf]
      %v1900 = vsel %vm1846, %v1769, %v1899
      %1901 = vst [vmem:[#allocation3 + $0x54] sm:$0xf] %v1900
      %1902 = vst.msk [vmem:[#allocation3 + $0x58] sm:$0xf] %vm1850, %v1778
      %v1903 = vld [vmem:[#allocation3 + $0x5c] sm:$0x1]
      %v1904 = vsel %vm1853, %v1779, %v1903
      %1905 = vst [vmem:[#allocation3 + $0x5c] sm:$0x1] %v1904
      %v1906 = vld [vmem:[#allocation3 + $0x60] sm:$0xf]
      %v1907 = vsel %vm1846, %v1786, %v1906
      %1908 = vst [vmem:[#allocation3 + $0x60] sm:$0xf] %v1907
      %1909 = vst.msk [vmem:[#allocation3 + $0x64] sm:$0xf] %vm1850, %v1795
      %v1910 = vld [vmem:[#allocation3 + $0x68] sm:$0x1]
      %v1911 = vsel %vm1853, %v1796, %v1910
      %1912 = vst [vmem:[#allocation3 + $0x68] sm:$0x1] %v1911
      %v1913 = vld [vmem:[#allocation3 + $0x6c] sm:$0xf]
      %v1914 = vsel %vm1846, %v1803, %v1913
      %1915 = vst [vmem:[#allocation3 + $0x6c] sm:$0xf] %v1914
      %1916 = vst.msk [vmem:[#allocation3 + $0x70] sm:$0xf] %vm1850, %v1812
      %v1917 = vld [vmem:[#allocation3 + $0x74] sm:$0x1]
      %v1918 = vsel %vm1853, %v1813, %v1917
      %1919 = vst [vmem:[#allocation3 + $0x74] sm:$0x1] %v1918
      // Predicated region
      $region45: #{basic_block_forward.1} parent=39 // pred_check
        %p1920 = pneg %p247
      $region46: #{basic_block_forward.1} parent=39 // pred_check_branch
        %1922 = sbr.rel (%p1920) target = $region48
      $region47: #{basic_block_forward.1} parent=39 // pred_region
        %1923 = vst.msk [vmem:[#allocation3] sm:$0xf] %vm1850, 0
        %1924 = vst.msk [vmem:[#allocation3 + $0x4] sm:$0xf] %vm1850, 0
        %vm1925 = vcmask 24576
        %1926 = vst.msk [vmem:[#allocation3 + $0x8] sm:$0x1] %vm1925, 0
      $region48: #{basic_block_forward.1} parent=39 // pred_fallthru
        _
      %p1927 = scmp.eq.s32.totalorder %s21, 1
      // Predicated region
      $region49: #{basic_block_forward.1} parent=39 // pred_check
        %p1928 = pneg %p1927
      $region50: #{basic_block_forward.1} parent=39 // pred_check_branch
        %1930 = sbr.rel (%p1928) target = $region52
      $region51: #{basic_block_forward.1} parent=39 // pred_region
        %s1931 = scalar_lea.vmem [#allocation3], 108
        %1932 = vst.msk [vmem:[%s1931] sm:$0xf] %vm1850, 0
        %1933 = vst.msk [vmem:[%s1931 + $0x4] sm:$0xf] %vm1850, 0
        %vm1934 = vcmask 24576
        %1935 = vst.msk [vmem:[%s1931 + $0x8] sm:$0x1] %vm1934, 0
      $region52: #{basic_block_forward.1} parent=39 // pred_fallthru
        _
      %v1936 = vld [vmem:[#allocation3] sm:$0xf]
      %v1937 = vld [vmem:[#allocation3 + $0x4] sm:$0xf]
      %v1938 = vld [vmem:[#allocation3 + $0x8] sm:$0x1]
      %v1939 = vld [vmem:[#allocation3 + $0xc] sm:$0xf]
      %v1940 = vld [vmem:[#allocation3 + $0x10] sm:$0xf]
      %v1941 = vld [vmem:[#allocation3 + $0x14] sm:$0x1]
      %v1942 = vld [vmem:[#allocation3 + $0x18] sm:$0xf]
      %v1943 = vld [vmem:[#allocation3 + $0x1c] sm:$0xf]
      %v1944 = vld [vmem:[#allocation3 + $0x20] sm:$0x1]
      %v1945 = vld [vmem:[#allocation3 + $0x24] sm:$0xf]
      %v1946 = vld [vmem:[#allocation3 + $0x28] sm:$0xf]
      %v1947 = vld [vmem:[#allocation3 + $0x2c] sm:$0x1]
      %v1948 = vld [vmem:[#allocation3 + $0x30] sm:$0xf]
      %v1949 = vld [vmem:[#allocation3 + $0x34] sm:$0xf]
      %v1950 = vld [vmem:[#allocation3 + $0x38] sm:$0x1]
      %v1951 = vld [vmem:[#allocation3 + $0x3c] sm:$0xf]
      %v1952 = vld [vmem:[#allocation3 + $0x40] sm:$0xf]
      %v1953 = vld [vmem:[#allocation3 + $0x44] sm:$0x1]
      %v1954 = vld [vmem:[#allocation3 + $0x48] sm:$0xf]
      %v1955 = vld [vmem:[#allocation3 + $0x4c] sm:$0xf]
      %v1956 = vld [vmem:[#allocation3 + $0x50] sm:$0x1]
      %v1957 = vld [vmem:[#allocation3 + $0x54] sm:$0xf]
      %v1958 = vld [vmem:[#allocation3 + $0x58] sm:$0xf]
      %v1959 = vld [vmem:[#allocation3 + $0x5c] sm:$0x1]
      %v1960 = vld [vmem:[#allocation3 + $0x60] sm:$0xf]
      %v1961 = vld [vmem:[#allocation3 + $0x64] sm:$0xf]
      %v1962 = vld [vmem:[#allocation3 + $0x68] sm:$0x1]
      %v1963 = vld [vmem:[#allocation3 + $0x6c] sm:$0xf]
      %v1964 = vld [vmem:[#allocation3 + $0x70] sm:$0xf]
      %v1965 = vld [vmem:[#allocation3 + $0x74] sm:$0x1]
      %v1982 = vunpack.c.l.b16 %v1936
      %v1983 = vunpack.c.l.b16 %v1937
      %v1984 = vunpack.c.l.b16 %v1939
      %v1985 = vunpack.c.l.b16 %v1940
      %v1986 = vunpack.c.l.b16 %v1942
      %v1987 = vunpack.c.l.b16 %v1943
      %v1988 = vunpack.c.l.b16 %v1945
      %v1989 = vunpack.c.l.b16 %v1946
      %v1990 = vunpack.c.l.b16 %v1948
      %v1991 = vunpack.c.l.b16 %v1949
      %v1992 = vunpack.c.l.b16 %v1951
      %v1993 = vunpack.c.l.b16 %v1952
      %v1994 = vunpack.c.l.b16 %v1954
      %v1995 = vunpack.c.l.b16 %v1955
      %v1996 = vunpack.c.l.b16 %v1957
      %v1997 = vunpack.c.l.b16 %v1958
      %v1998 = vpack.c.b16 %v1983, %v1982
      %v1999 = vpack.c.b16 %v1985, %v1984
      %v2000 = vpack.c.b16 %v1987, %v1986
      %v2001 = vpack.c.b16 %v1989, %v1988
      %v2002 = vpack.c.b16 %v1991, %v1990
      %v2003 = vpack.c.b16 %v1993, %v1992
      %v2004 = vpack.c.b16 %v1995, %v1994
      %v2005 = vpack.c.b16 %v1997, %v1996
      %v2014 = vunpack.c.l.b16 %v1938
      %v2015 = vunpack.c.l.b16 %v1941
      %v2016 = vunpack.c.l.b16 %v1944
      %v2017 = vunpack.c.l.b16 %v1947
      %v2018 = vunpack.c.l.b16 %v1950
      %v2019 = vunpack.c.l.b16 %v1953
      %v2020 = vunpack.c.l.b16 %v1956
      %v2021 = vunpack.c.l.b16 %v1959
      %v2022 = vpack.c.b16 %v2014, %v2014
      %v2023 = vpack.c.b16 %v2015, %v2015
      %v2024 = vpack.c.b16 %v2016, %v2016
      %v2025 = vpack.c.b16 %v2017, %v2017
      %v2026 = vpack.c.b16 %v2018, %v2018
      %v2027 = vpack.c.b16 %v2019, %v2019
      %v2028 = vpack.c.b16 %v2020, %v2020
      %v2029 = vpack.c.b16 %v2021, %v2021
      %v2031 = vshrl.u32 %v1998, 16
      %v2033 = vshll.u32 %v1998, 16
      %v2035 = vrot.slane %v2033, 1
      %v2036 = vor.u32 %v2031, %v2035
      %v2038 = vshll.u32 %v2022, 16
      %v2040 = vrot.slane %v2038, 1
      %v2041 = vsel %vm967, %v2036, %v2040
      %v2043 = vshrl.u32 %v1999, 16
      %v2045 = vshll.u32 %v1999, 16
      %v2047 = vrot.slane %v2045, 1
      %v2048 = vor.u32 %v2043, %v2047
      %v2050 = vshll.u32 %v2023, 16
      %v2052 = vrot.slane %v2050, 1
      %v2053 = vsel %vm967, %v2048, %v2052
      %v2055 = vshrl.u32 %v2000, 16
      %v2057 = vshll.u32 %v2000, 16
      %v2059 = vrot.slane %v2057, 1
      %v2060 = vor.u32 %v2055, %v2059
      %v2062 = vshll.u32 %v2024, 16
      %v2064 = vrot.slane %v2062, 1
      %v2065 = vsel %vm967, %v2060, %v2064
      %v2067 = vshrl.u32 %v2001, 16
      %v2069 = vshll.u32 %v2001, 16
      %v2071 = vrot.slane %v2069, 1
      %v2072 = vor.u32 %v2067, %v2071
      %v2074 = vshll.u32 %v2025, 16
      %v2076 = vrot.slane %v2074, 1
      %v2077 = vsel %vm967, %v2072, %v2076
      %v2079 = vshrl.u32 %v2002, 16
      %v2081 = vshll.u32 %v2002, 16
      %v2083 = vrot.slane %v2081, 1
      %v2084 = vor.u32 %v2079, %v2083
      %v2086 = vshll.u32 %v2026, 16
      %v2088 = vrot.slane %v2086, 1
      %v2089 = vsel %vm967, %v2084, %v2088
      %v2091 = vshrl.u32 %v2003, 16
      %v2093 = vshll.u32 %v2003, 16
      %v2095 = vrot.slane %v2093, 1
      %v2096 = vor.u32 %v2091, %v2095
      %v2098 = vshll.u32 %v2027, 16
      %v2100 = vrot.slane %v2098, 1
      %v2101 = vsel %vm967, %v2096, %v2100
      %v2103 = vshrl.u32 %v2004, 16
      %v2105 = vshll.u32 %v2004, 16
      %v2107 = vrot.slane %v2105, 1
      %v2108 = vor.u32 %v2103, %v2107
      %v2110 = vshll.u32 %v2028, 16
      %v2112 = vrot.slane %v2110, 1
      %v2113 = vsel %vm967, %v2108, %v2112
      %v2115 = vshrl.u32 %v2005, 16
      %v2117 = vshll.u32 %v2005, 16
      %v2119 = vrot.slane %v2117, 1
      %v2120 = vor.u32 %v2115, %v2119
      %v2122 = vshll.u32 %v2029, 16
      %v2124 = vrot.slane %v2122, 1
      %v2125 = vsel %vm967, %v2120, %v2124
      %2126 = vrot.lane.b32.xlu0 %v2041, 4
      %v2127 = vpop.permute.xlu0 %2126
      %2128 = vrot.lane.b32.xlu0 %v2053, 4
      %v2129 = vpop.permute.xlu0 %2128
      %2130 = vrot.lane.b32.xlu0 %v2065, 4
      %v2131 = vpop.permute.xlu0 %2130
      %2132 = vrot.lane.b32.xlu0 %v2077, 4
      %v2133 = vpop.permute.xlu0 %2132
      %2134 = vrot.lane.b32.xlu0 %v2089, 4
      %v2135 = vpop.permute.xlu0 %2134
      %2136 = vrot.lane.b32.xlu0 %v2101, 4
      %v2137 = vpop.permute.xlu0 %2136
      %2138 = vrot.lane.b32.xlu0 %v2113, 4
      %v2139 = vpop.permute.xlu0 %2138
      %2140 = vrot.lane.b32.xlu0 %v2125, 4
      %v2141 = vpop.permute.xlu0 %2140
      %v2142 = vrot.slane %v1998, 1
      %v2143 = vrot.slane %v2022, 1
      %v2144 = vsel %vm1108, %v2142, %v2143
      %v2145 = vrot.slane %v1999, 1
      %v2146 = vrot.slane %v2023, 1
      %v2147 = vsel %vm1108, %v2145, %v2146
      %v2148 = vrot.slane %v2000, 1
      %v2149 = vrot.slane %v2024, 1
      %v2150 = vsel %vm1108, %v2148, %v2149
      %v2151 = vrot.slane %v2001, 1
      %v2152 = vrot.slane %v2025, 1
      %v2153 = vsel %vm1108, %v2151, %v2152
      %v2154 = vrot.slane %v2002, 1
      %v2155 = vrot.slane %v2026, 1
      %v2156 = vsel %vm1108, %v2154, %v2155
      %v2157 = vrot.slane %v2003, 1
      %v2158 = vrot.slane %v2027, 1
      %v2159 = vsel %vm1108, %v2157, %v2158
      %v2160 = vrot.slane %v2004, 1
      %v2161 = vrot.slane %v2028, 1
      %v2162 = vsel %vm1108, %v2160, %v2161
      %v2163 = vrot.slane %v2005, 1
      %v2164 = vrot.slane %v2029, 1
      %v2165 = vsel %vm1108, %v2163, %v2164
      %2166 = vrot.lane.b32.xlu0 %v2144, 8
      %v2167 = vpop.permute.xlu0 %2166
      %2168 = vrot.lane.b32.xlu0 %v2147, 8
      %v2169 = vpop.permute.xlu0 %2168
      %2170 = vrot.lane.b32.xlu0 %v2150, 8
      %v2171 = vpop.permute.xlu0 %2170
      %2172 = vrot.lane.b32.xlu0 %v2153, 8
      %v2173 = vpop.permute.xlu0 %2172
      %2174 = vrot.lane.b32.xlu0 %v2156, 8
      %v2175 = vpop.permute.xlu0 %2174
      %2176 = vrot.lane.b32.xlu0 %v2159, 8
      %v2177 = vpop.permute.xlu0 %2176
      %2178 = vrot.lane.b32.xlu0 %v2162, 8
      %v2179 = vpop.permute.xlu0 %2178
      %2180 = vrot.lane.b32.xlu0 %v2165, 8
      %v2181 = vpop.permute.xlu0 %2180
      %v2184 = vunpack.c.l.b16 %v1960
      %v2185 = vunpack.c.l.b16 %v1961
      %v2186 = vpack.c.b16 %v2185, %v2184
      %2187 = vrot.lane.b32.xlu0 %v1999, 12
      %v2188 = vpop.permute.xlu0 %2187
      %2189 = vrot.lane.b32.xlu0 %v2000, 12
      %v2190 = vpop.permute.xlu0 %2189
      %2191 = vrot.lane.b32.xlu0 %v2001, 12
      %v2192 = vpop.permute.xlu0 %2191
      %2193 = vrot.lane.b32.xlu0 %v2002, 12
      %v2194 = vpop.permute.xlu0 %2193
      %2195 = vrot.lane.b32.xlu0 %v2003, 12
      %v2196 = vpop.permute.xlu0 %2195
      %2197 = vrot.lane.b32.xlu0 %v2004, 12
      %v2198 = vpop.permute.xlu0 %2197
      %2199 = vrot.lane.b32.xlu0 %v2005, 12
      %v2200 = vpop.permute.xlu0 %2199
      %2201 = vrot.lane.b32.xlu0 %v2186, 12
      %v2202 = vpop.permute.xlu0 %2201
      %v2204 = vunpack.c.l.b16 %v1962
      %v2205 = vpack.c.b16 %v2204, %v2204
      %v2207 = vshrl.u32 %v2186, 16
      %v2209 = vshll.u32 %v2186, 16
      %v2211 = vrot.slane %v2209, 1
      %v2212 = vor.u32 %v2207, %v2211
      %v2214 = vshll.u32 %v2205, 16
      %v2216 = vrot.slane %v2214, 1
      %v2217 = vsel %vm967, %v2212, %v2216
      %2218 = vrot.lane.b32.xlu0 %v2053, 16
      %v2219 = vpop.permute.xlu0 %2218
      %2220 = vrot.lane.b32.xlu0 %v2065, 16
      %v2221 = vpop.permute.xlu0 %2220
      %2222 = vrot.lane.b32.xlu0 %v2077, 16
      %v2223 = vpop.permute.xlu0 %2222
      %2224 = vrot.lane.b32.xlu0 %v2089, 16
      %v2225 = vpop.permute.xlu0 %2224
      %2226 = vrot.lane.b32.xlu0 %v2101, 16
      %v2227 = vpop.permute.xlu0 %2226
      %2228 = vrot.lane.b32.xlu0 %v2113, 16
      %v2229 = vpop.permute.xlu0 %2228
      %2230 = vrot.lane.b32.xlu0 %v2125, 16
      %v2231 = vpop.permute.xlu0 %2230
      %2232 = vrot.lane.b32.xlu0 %v2217, 16
      %v2233 = vpop.permute.xlu0 %2232
      %v2234 = vrot.slane %v2186, 1
      %v2235 = vrot.slane %v2205, 1
      %v2236 = vsel %vm1108, %v2234, %v2235
      %2237 = vrot.lane.b32.xlu0 %v2147, 20
      %v2238 = vpop.permute.xlu0 %2237
      %2239 = vrot.lane.b32.xlu0 %v2150, 20
      %v2240 = vpop.permute.xlu0 %2239
      %2241 = vrot.lane.b32.xlu0 %v2153, 20
      %v2242 = vpop.permute.xlu0 %2241
      %2243 = vrot.lane.b32.xlu0 %v2156, 20
      %v2244 = vpop.permute.xlu0 %2243
      %2245 = vrot.lane.b32.xlu0 %v2159, 20
      %v2246 = vpop.permute.xlu0 %2245
      %2247 = vrot.lane.b32.xlu0 %v2162, 20
      %v2248 = vpop.permute.xlu0 %2247
      %2249 = vrot.lane.b32.xlu0 %v2165, 20
      %v2250 = vpop.permute.xlu0 %2249
      %2251 = vrot.lane.b32.xlu0 %v2236, 20
      %v2252 = vpop.permute.xlu0 %2251
      %v2255 = vunpack.c.l.b16 %v1963
      %v2256 = vunpack.c.l.b16 %v1964
      %v2257 = vpack.c.b16 %v2256, %v2255
      %2258 = vrot.lane.b32.xlu0 %v2000, 24
      %v2259 = vpop.permute.xlu0 %2258
      %2260 = vrot.lane.b32.xlu0 %v2001, 24
      %v2261 = vpop.permute.xlu0 %2260
      %2262 = vrot.lane.b32.xlu0 %v2002, 24
      %v2263 = vpop.permute.xlu0 %2262
      %2264 = vrot.lane.b32.xlu0 %v2003, 24
      %v2265 = vpop.permute.xlu0 %2264
      %2266 = vrot.lane.b32.xlu0 %v2004, 24
      %v2267 = vpop.permute.xlu0 %2266
      %2268 = vrot.lane.b32.xlu0 %v2005, 24
      %v2269 = vpop.permute.xlu0 %2268
      %2270 = vrot.lane.b32.xlu0 %v2186, 24
      %v2271 = vpop.permute.xlu0 %2270
      %2272 = vrot.lane.b32.xlu0 %v2257, 24
      %v2273 = vpop.permute.xlu0 %2272
      %v2275 = vunpack.c.l.b16 %v1965
      %v2276 = vpack.c.b16 %v2275, %v2275
      %v2278 = vshrl.u32 %v2257, 16
      %v2280 = vshll.u32 %v2257, 16
      %v2282 = vrot.slane %v2280, 1
      %v2283 = vor.u32 %v2278, %v2282
      %v2285 = vshll.u32 %v2276, 16
      %v2287 = vrot.slane %v2285, 1
      %v2288 = vsel %vm967, %v2283, %v2287
      %2289 = vrot.lane.b32.xlu0 %v2065, 28
      %v2290 = vpop.permute.xlu0 %2289
      %2291 = vrot.lane.b32.xlu0 %v2077, 28
      %v2292 = vpop.permute.xlu0 %2291
      %2293 = vrot.lane.b32.xlu0 %v2089, 28
      %v2294 = vpop.permute.xlu0 %2293
      %2295 = vrot.lane.b32.xlu0 %v2101, 28
      %v2296 = vpop.permute.xlu0 %2295
      %2297 = vrot.lane.b32.xlu0 %v2113, 28
      %v2298 = vpop.permute.xlu0 %2297
      %2299 = vrot.lane.b32.xlu0 %v2125, 28
      %v2300 = vpop.permute.xlu0 %2299
      %2301 = vrot.lane.b32.xlu0 %v2217, 28
      %v2302 = vpop.permute.xlu0 %2301
      %2303 = vrot.lane.b32.xlu0 %v2288, 28
      %v2304 = vpop.permute.xlu0 %2303
      %v2305 = vrot.slane %v2257, 1
      %v2306 = vrot.slane %v2276, 1
      %v2307 = vsel %vm1108, %v2305, %v2306
      %2308 = vrot.lane.b32.xlu0 %v2150, 32
      %v2309 = vpop.permute.xlu0 %2308
      %2310 = vrot.lane.b32.xlu0 %v2153, 32
      %v2311 = vpop.permute.xlu0 %2310
      %2312 = vrot.lane.b32.xlu0 %v2156, 32
      %v2313 = vpop.permute.xlu0 %2312
      %2314 = vrot.lane.b32.xlu0 %v2159, 32
      %v2315 = vpop.permute.xlu0 %2314
      %2316 = vrot.lane.b32.xlu0 %v2162, 32
      %v2317 = vpop.permute.xlu0 %2316
      %2318 = vrot.lane.b32.xlu0 %v2165, 32
      %v2319 = vpop.permute.xlu0 %2318
      %2320 = vrot.lane.b32.xlu0 %v2236, 32
      %v2321 = vpop.permute.xlu0 %2320
      %2322 = vrot.lane.b32.xlu0 %v2307, 32
      %v2323 = vpop.permute.xlu0 %2322
      %v2325 = vsel %vm1325, %v1998, %v2127
      %v2327 = vsel %vm1325, %v1999, %v2129
      %v2329 = vsel %vm1325, %v2000, %v2131
      %v2331 = vsel %vm1325, %v2001, %v2133
      %v2333 = vsel %vm1325, %v2002, %v2135
      %v2335 = vsel %vm1325, %v2003, %v2137
      %v2337 = vsel %vm1325, %v2004, %v2139
      %v2339 = vsel %vm1325, %v2005, %v2141
      %v2341 = vsel %vm1346, %v2325, %v2167
      %v2343 = vsel %vm1346, %v2327, %v2169
      %v2345 = vsel %vm1346, %v2329, %v2171
      %v2347 = vsel %vm1346, %v2331, %v2173
      %v2349 = vsel %vm1346, %v2333, %v2175
      %v2351 = vsel %vm1346, %v2335, %v2177
      %v2353 = vsel %vm1346, %v2337, %v2179
      %v2355 = vsel %vm1346, %v2339, %v2181
      %v2357 = vsel %vm1367, %v2341, %v2188
      %v2359 = vsel %vm1367, %v2343, %v2190
      %v2361 = vsel %vm1367, %v2345, %v2192
      %v2363 = vsel %vm1367, %v2347, %v2194
      %v2365 = vsel %vm1367, %v2349, %v2196
      %v2367 = vsel %vm1367, %v2351, %v2198
      %v2369 = vsel %vm1367, %v2353, %v2200
      %v2371 = vsel %vm1367, %v2355, %v2202
      %v2373 = vsel %vm1388, %v2357, %v2219
      %v2375 = vsel %vm1388, %v2359, %v2221
      %v2377 = vsel %vm1388, %v2361, %v2223
      %v2379 = vsel %vm1388, %v2363, %v2225
      %v2381 = vsel %vm1388, %v2365, %v2227
      %v2383 = vsel %vm1388, %v2367, %v2229
      %v2385 = vsel %vm1388, %v2369, %v2231
      %v2387 = vsel %vm1388, %v2371, %v2233
      %v2389 = vsel %vm1409, %v2373, %v2238
      %v2391 = vsel %vm1409, %v2375, %v2240
      %v2393 = vsel %vm1409, %v2377, %v2242
      %v2395 = vsel %vm1409, %v2379, %v2244
      %v2397 = vsel %vm1409, %v2381, %v2246
      %v2399 = vsel %vm1409, %v2383, %v2248
      %v2401 = vsel %vm1409, %v2385, %v2250
      %v2403 = vsel %vm1409, %v2387, %v2252
      %v2405 = vsel %vm1430, %v2389, %v2259
      %v2407 = vsel %vm1430, %v2391, %v2261
      %v2409 = vsel %vm1430, %v2393, %v2263
      %v2411 = vsel %vm1430, %v2395, %v2265
      %v2413 = vsel %vm1430, %v2397, %v2267
      %v2415 = vsel %vm1430, %v2399, %v2269
      %v2417 = vsel %vm1430, %v2401, %v2271
      %v2419 = vsel %vm1430, %v2403, %v2273
      %v2421 = vsel %vm1451, %v2405, %v2290
      %v2423 = vsel %vm1451, %v2407, %v2292
      %v2425 = vsel %vm1451, %v2409, %v2294
      %v2427 = vsel %vm1451, %v2411, %v2296
      %v2429 = vsel %vm1451, %v2413, %v2298
      %v2431 = vsel %vm1451, %v2415, %v2300
      %v2433 = vsel %vm1451, %v2417, %v2302
      %v2435 = vsel %vm1451, %v2419, %v2304
      %v2437 = vsel %vm1472, %v2421, %v2309
      %v2439 = vsel %vm1472, %v2423, %v2311
      %v2441 = vsel %vm1472, %v2425, %v2313
      %v2443 = vsel %vm1472, %v2427, %v2315
      %v2445 = vsel %vm1472, %v2429, %v2317
      %v2447 = vsel %vm1472, %v2431, %v2319
      %v2449 = vsel %vm1472, %v2433, %v2321
      %v2451 = vsel %vm1472, %v2435, %v2323
      %v2452 = vld [vmem:[%s3] sm:$0xf]
      %v2453 = vld [vmem:[%s3 + $0x4] sm:$0xf]
      %v2454 = vld [vmem:[%s3 + $0x8] sm:$0xf]
      %v2455 = vld [vmem:[%s3 + $0xc] sm:$0xf]
      %v2456 = vld [vmem:[%s3 + $0x10] sm:$0x3]
      %v2457 = vld [vmem:[%s4] sm:$0x1]
      %v2459 = vperm.slane %v2457, 0
      %v2466 = vunpack.c.l.b16 %v2452
      %v2467 = vunpack.c.l.b16 %v2453
      %v2468 = vunpack.c.l.b16 %v2454
      %v2469 = vunpack.c.l.b16 %v2455
      %v2470 = vunpack.c.l.b16 %v2456
      %v2471 = vpack.c.b16 %v2467, %v2466
      %v2472 = vpack.c.b16 %v2469, %v2468
      %v2473 = vpack.c.b16 %v2470, %v2470
      %v2476 = vsel %vm1517, %v2437, 0
      %v2478 = vsel %vm1517, %v2439, 0
      %v2480 = vsel %vm1517, %v2441, 0
      %v2482 = vsel %vm1517, %v2443, 0
      %v2484 = vsel %vm1517, %v2445, 0
      %v2486 = vsel %vm1517, %v2447, 0
      %v2488 = vsel %vm1517, %v2449, 0
      %v2490 = vsel %vm1517, %v2451, 0
      %v2493 = vsel %vm1538, %v2473, 0
      %2495 = vmatpush.bf16.msra.mxu0 0
      %2496 = vmatpush.bf16.msra.mxu0 0
      %2497 = vmatpush.bf16.msra.mxu0 0
      %2498 = vmatpush.bf16.msra.mxu0 0
      %2499 = vmatpush.bf16.msra.mxu0 0
      %2500 = vmatpush.bf16.msra.mxu0 %v2493
      %2501 = vmatpush.bf16.msra.mxu0 %v2472
      %2502 = vmatpush.bf16.msra.mxu0 %v2471
      %2503 = vmatmul.bf16.gmra.mxu0 %v2476
      %v2504 = vpop.f32.mrf.mxu0
      %v2505 = vadd.f32 %v2459, %v2504
      %v2506 = vpop.f32.mrf.mxu0
      %v2507 = vadd.f32 %v2459, %v2506
      %2508 = vmatmul.bf16.gmra.mxu0 %v2478
      %v2509 = vpop.f32.mrf.mxu0
      %v2510 = vadd.f32 %v2459, %v2509
      %v2511 = vpop.f32.mrf.mxu0
      %v2512 = vadd.f32 %v2459, %v2511
      %2513 = vmatmul.bf16.gmra.mxu0 %v2480
      %v2514 = vpop.f32.mrf.mxu0
      %v2515 = vadd.f32 %v2459, %v2514
      %v2516 = vpop.f32.mrf.mxu0
      %v2517 = vadd.f32 %v2459, %v2516
      %2518 = vmatmul.bf16.gmra.mxu0 %v2482
      %v2519 = vpop.f32.mrf.mxu0
      %v2520 = vadd.f32 %v2459, %v2519
      %v2521 = vpop.f32.mrf.mxu0
      %v2522 = vadd.f32 %v2459, %v2521
      %2523 = vmatmul.bf16.gmra.mxu0 %v2484
      %v2524 = vpop.f32.mrf.mxu0
      %v2525 = vadd.f32 %v2459, %v2524
      %v2526 = vpop.f32.mrf.mxu0
      %v2527 = vadd.f32 %v2459, %v2526
      %2528 = vmatmul.bf16.gmra.mxu0 %v2486
      %v2529 = vpop.f32.mrf.mxu0
      %v2530 = vadd.f32 %v2459, %v2529
      %v2531 = vpop.f32.mrf.mxu0
      %v2532 = vadd.f32 %v2459, %v2531
      %2533 = vmatmul.bf16.gmra.mxu0 %v2488
      %v2534 = vpop.f32.mrf.mxu0
      %v2535 = vadd.f32 %v2459, %v2534
      %v2536 = vpop.f32.mrf.mxu0
      %v2537 = vadd.f32 %v2459, %v2536
      %2538 = vmatmul.bf16.gmra.mxu0 %v2490
      %v2539 = vpop.f32.mrf.mxu0
      %v2540 = vadd.f32 %v2459, %v2539
      %v2541 = vpop.f32.mrf.mxu0
      %v2542 = vadd.f32 %v2459, %v2541
      %2543 = vdwg.mxu0
      %s2544 = smul.u32 %s246, 16
      %s2545 = scalar_lea.vmem %s236, %s2544
      %v2546 = vld [vmem:[%s2545] sm:$0xff]
      %v2547 = vld [vmem:[%s2545 + $0x8] sm:$0xff]
      %v2548 = vld [vmem:[%s2545 + $0x10] sm:$0xff]
      %v2549 = vld [vmem:[%s2545 + $0x18] sm:$0xff]
      %v2550 = vld [vmem:[%s2545 + $0x20] sm:$0xff]
      %v2551 = vld [vmem:[%s2545 + $0x28] sm:$0xff]
      %v2552 = vld [vmem:[%s2545 + $0x30] sm:$0xff]
      %v2553 = vld [vmem:[%s2545 + $0x38] sm:$0xff]
      %v2554 = vld [vmem:[%s2545 + $0x40] sm:$0xff]
      %v2555 = vld [vmem:[%s2545 + $0x48] sm:$0xff]
      %v2556 = vld [vmem:[%s2545 + $0x50] sm:$0xff]
      %v2557 = vld [vmem:[%s2545 + $0x58] sm:$0xff]
      %v2558 = vld [vmem:[%s2545 + $0x60] sm:$0xff]
      %v2559 = vld [vmem:[%s2545 + $0x68] sm:$0xff]
      %v2560 = vld [vmem:[%s2545 + $0x70] sm:$0xff]
      %v2561 = vld [vmem:[%s2545 + $0x78] sm:$0xff]
      %v2562 = vadd.f32 %v2505, %v2546
      %v2563 = vadd.f32 %v2507, %v2547
      %v2564 = vadd.f32 %v2510, %v2548
      %v2565 = vadd.f32 %v2512, %v2549
      %v2566 = vadd.f32 %v2515, %v2550
      %v2567 = vadd.f32 %v2517, %v2551
      %v2568 = vadd.f32 %v2520, %v2552
      %v2569 = vadd.f32 %v2522, %v2553
      %v2570 = vadd.f32 %v2525, %v2554
      %v2571 = vadd.f32 %v2527, %v2555
      %v2572 = vadd.f32 %v2530, %v2556
      %v2573 = vadd.f32 %v2532, %v2557
      %v2574 = vadd.f32 %v2535, %v2558
      %v2575 = vadd.f32 %v2537, %v2559
      %v2576 = vadd.f32 %v2540, %v2560
      %v2577 = vadd.f32 %v2542, %v2561
      %v2578 = vmax.f32 %v2562, 0.0
      %v2579 = vmax.f32 %v2563, 0.0
      %v2580 = vmax.f32 %v2564, 0.0
      %v2581 = vmax.f32 %v2565, 0.0
      %v2582 = vmax.f32 %v2566, 0.0
      %v2583 = vmax.f32 %v2567, 0.0
      %v2584 = vmax.f32 %v2568, 0.0
      %v2585 = vmax.f32 %v2569, 0.0
      %v2586 = vmax.f32 %v2570, 0.0
      %v2587 = vmax.f32 %v2571, 0.0
      %v2588 = vmax.f32 %v2572, 0.0
      %v2589 = vmax.f32 %v2573, 0.0
      %v2590 = vmax.f32 %v2574, 0.0
      %v2591 = vmax.f32 %v2575, 0.0
      %v2592 = vmax.f32 %v2576, 0.0
      %v2593 = vmax.f32 %v2577, 0.0
      %2594 = vxpose.xlu0.b32.start [1/16] %v2578, 128
      %2595 = vxpose.xlu0.b32.cont [2/16] %v2579, 128
      %2596 = vxpose.xlu0.b32.cont [3/16] %v2580, 128
      %2597 = vxpose.xlu0.b32.cont [4/16] %v2581, 128
      %2598 = vxpose.xlu0.b32.cont [5/16] %v2582, 128
      %2599 = vxpose.xlu0.b32.cont [6/16] %v2583, 128
      %2600 = vxpose.xlu0.b32.cont [7/16] %v2584, 128
      %2601 = vxpose.xlu0.b32.cont [8/16] %v2585, 128
      %2602 = vxpose.xlu0.b32.cont [9/16] %v2586, 128
      %2603 = vxpose.xlu0.b32.cont [10/16] %v2587, 128
      %2604 = vxpose.xlu0.b32.cont [11/16] %v2588, 128
      %2605 = vxpose.xlu0.b32.cont [12/16] %v2589, 128
      %2606 = vxpose.xlu0.b32.cont [13/16] %v2590, 128
      %2607 = vxpose.xlu0.b32.cont [14/16] %v2591, 128
      %2608 = vxpose.xlu0.b32.cont [15/16] %v2592, 128
      %2609 = vxpose.xlu0.b32.end [16/16] %v2593, 128
      %v2610 = vpop.trf.xlu0
      %v2611 = vpop.trf.xlu0
      %v2612 = vpop.trf.xlu0
      %v2613 = vpop.trf.xlu0
      %v2614 = vpop.trf.xlu0
      %v2615 = vpop.trf.xlu0
      %v2616 = vpop.trf.xlu0
      %v2617 = vpop.trf.xlu0
      %v2618 = vpop.trf.xlu0
      %v2619 = vpop.trf.xlu0
      %v2620 = vpop.trf.xlu0
      %v2621 = vpop.trf.xlu0
      %v2622 = vpop.trf.xlu0
      %v2623 = vpop.trf.xlu0
      %v2624 = vpop.trf.xlu0
      %v2625 = vpop.trf.xlu0
      %2626 = vst [vmem:[%s244] sm:$0xf] %v2610
      %p2627 = scmp.lt.s32.totalorder %s20, 1
      %s2628 = scalar_select %p2627, %s20, 1
      %p2629 = scmp.lt.s32.totalorder %s21, 1
      %s2630 = scalar_select %p2629, %s21, 1
      %s2631 = smul.addr %s2628, 2
      %s2632 = sadd.s32 %s2630, %s2631
      %s2633 = smul.addr %s2632, 4
      %s2634 = scalar_lea.vmem %s5, %s2633
      // Predicated region
      $region53: #{basic_block_forward.1} parent=39 // pred_check
        %p2635 = pneg %p158
      $region54: #{basic_block_forward.1} parent=39 // pred_check_branch
        %2637 = sbr.rel (%p2635) target = $region56
      $region55: #{basic_block_forward.1} parent=39 // pred_region
        _
      $region56: #{basic_block_forward.1} parent=39 // pred_fallthru
        _
    $region40: #{basic_block_forward.1} parent=5 // pred_fallthru
      _
    %p2638 = scmp.le.s32.totalorder 2, %s11
    // Predicated region
    $region57: #{basic_block_forward.1} parent=5 // pred_check
      %p2639 = pneg %p2638
    $region58: #{basic_block_forward.1} parent=5 // pred_check_branch
      %2641 = sbr.rel (%p2639) target = $region60
    $region59: #{basic_block_forward.1} parent=5 // pred_region
      %s2642 = ssub.s32 %s11, 2
      // Predicated region
      $region61: #{basic_block_forward.1} parent=59 // pred_check
        %p2643 = pneg %p164
      $region62: #{basic_block_forward.1} parent=59 // pred_check_branch
        %2645 = sbr.rel (%p2643) target = $region64
      $region63: #{basic_block_forward.1} parent=59 // pred_region
        %p2646 = scmp.lt.s32.totalorder %s22, 1
        %s2647 = scalar_select %p2646, %s22, 1
        %p2648 = scmp.lt.s32.totalorder %s23, 1
        %s2649 = scalar_select %p2648, %s23, 1
        %s2650 = smul.addr %s2647, 2
        %s2651 = sadd.s32 %s2649, %s2650
        %s2652 = smul.addr %s2651, 4
        %s2653 = scalar_lea.vmem %s5, %s2652
      $region64: #{basic_block_forward.1} parent=59 // pred_fallthru
        _
    $region60: #{basic_block_forward.1} parent=5 // pred_fallthru
      _
  $region6: #{basic_block_forward.1} parent=0 // loop_footer
    %s15 = sadd.s32 1, %s11
  $region7: #{basic_block_forward.1} parent=0 // loop_footer_branch
    %10 = sbr.rel target = $region3
  $region8: #{basic_block_forward.1} parent=0 // loop_exit
    _

</llo_original>
